<compile_context>
chip_gen: v7x
topology: tpu7x:2x2x1
jax: 0.10.0
libtpu: 0.0.40
codegen_flags: <defaults>
</compile_context>

<pallas_src>
import functools

import jax
import jax.numpy as jnp
from jax.experimental import pallas as pl
from jax.experimental.pallas import tpu as pltpu

_VMEM_LIMIT = 32 * 1024 * 1024       # fits default scoped VMEM on v5e/v6e/v7x
_ROW_TILE_TARGET = 512               # ~85% of HBM roofline per measured sweep
_SQRT_HALF = 0.7071067811865476


# --------------------------------------------------------------------------
# in-kernel helpers
# --------------------------------------------------------------------------

def _layernorm(x, g, b, eps=1e-5):
    mu = jnp.mean(x, axis=-1, keepdims=True)
    var = jnp.mean(jnp.square(x - mu), axis=-1, keepdims=True)
    return (x - mu) * jax.lax.rsqrt(var + eps) * g + b


def _gelu_exact(x):
    return 0.5 * x * (1.0 + jax.lax.erf(x * _SQRT_HALF))


def _row_tile(m, target=_ROW_TILE_TARGET):
    """Largest row tile <= target that is a multiple of 8 and divides m."""
    if m <= target:
        return m
    best = None
    for t in range(8, target + 1, 8):
        if m % t == 0:
            best = t
    return best if best is not None else m


def _compiler_params():
    return pltpu.CompilerParams(
        dimension_semantics=("parallel",),
        vmem_limit_bytes=_VMEM_LIMIT)


# --------------------------------------------------------------------------
# Pallas kernels
# --------------------------------------------------------------------------

def _mm_bias_kernel(x_ref, w_ref, b_ref, o_ref):
    """x @ W + b (bf16 MXU inputs, f32 accumulation). Patch embedding."""
    y = jnp.dot(x_ref[...].astype(jnp.bfloat16), w_ref[...],
                preferred_element_type=jnp.float32)
    o_ref[...] = y + b_ref[...]


def _ln_mm_kernel(x_ref, g_ref, beta_ref, w_ref, b_ref, o_ref):
    """LayerNorm(x) @ W + b (classification head)."""
    xn = _layernorm(x_ref[...].astype(jnp.float32), g_ref[...], beta_ref[...])
    y = jnp.dot(xn.astype(jnp.bfloat16), w_ref[...],
                preferred_element_type=jnp.float32)
    o_ref[...] = y + b_ref[...]


def _encoder_block_kernel(x_ref, ln1g_ref, ln1b_ref, qkvw_ref, projw_ref,
                          projb_ref, ln2g_ref, ln2b_ref, w1_ref, b1_ref,
                          w2_ref, b2_ref, o_ref, *, num_heads, scale):
    """Fully fused transformer encoder block for one batch element.

    LN1 -> QKV -> multi-head softmax attention -> out projection -> +residual
    -> LN2 -> fc1 -> exact GELU -> fc2 -> +residual.

    Head split/merge happens via static column slices of the (S, 3E) qkv slab
    kept in VMEM; each head's (S, D) output is folded straight into the output
    projection accumulation, so the kernel's only HBM traffic is the input
    tile, the (resident) layer weights and the lane-dense (S, E) result.
    """
    x = x_ref[0].astype(jnp.float32)                           # (S, E)
    E = x.shape[-1]
    D = E // num_heads

    # ---- attention sub-block -------------------------------------------
    xn = _layernorm(x, ln1g_ref[...], ln1b_ref[...])
    qkv = jnp.dot(xn.astype(jnp.bfloat16), qkvw_ref[...],
                  preferred_element_type=jnp.float32)          # (S, 3E)
    pw = projw_ref[...]                                        # (E, E) bf16

    acc = jnp.zeros_like(x)                                    # (S, E) f32
    for h in range(num_heads):
        # qkv column layout: [q(h0..hH) | k(h0..hH) | v(h0..hH)], D cols each
        q = (qkv[:, h * D:(h + 1) * D] * scale).astype(jnp.bfloat16)
        k = qkv[:, E + h * D:E + (h + 1) * D].astype(jnp.bfloat16)
        v = qkv[:, 2 * E + h * D:2 * E + (h + 1) * D].astype(jnp.bfloat16)
        s = jax.lax.dot_general(q, k, (((1,), (1,)), ((), ())),
                                preferred_element_type=jnp.float32)   # (S, S)
        s = s - jnp.max(s, axis=-1, keepdims=True)
        e = jnp.exp(s)
        p = e * pl.reciprocal(jnp.sum(e, axis=-1, keepdims=True), approx=True)
        out_h = jnp.dot(p.astype(jnp.bfloat16), v,
                        preferred_element_type=jnp.float32)           # (S, D)
        # fold head output straight into the output projection
        acc = acc + jnp.dot(out_h.astype(jnp.bfloat16),
                            pw[h * D:(h + 1) * D, :],
                            preferred_element_type=jnp.float32)
    x = acc + projb_ref[...] + x                               # residual 1

    # ---- MLP sub-block ---------------------------------------------------
    xn2 = _layernorm(x, ln2g_ref[...], ln2b_ref[...])
    hdn = jnp.dot(xn2.astype(jnp.bfloat16), w1_ref[...],
                  preferred_element_type=jnp.float32) + b1_ref[...]
    hdn = _gelu_exact(hdn)
    # TODO(synk): dropout is identity (eval-mode semantics).
    y = jnp.dot(hdn.astype(jnp.bfloat16), w2_ref[...],
                preferred_element_type=jnp.float32) + b2_ref[...]
    o_ref[0] = y + x                                           # residual 2


# --------------------------------------------------------------------------
# pallas_call wrappers
# --------------------------------------------------------------------------

def matmul_bias(x, w, b):
    M, K = x.shape
    N = w.shape[1]
    TM = _row_tile(M)
    return pl.pallas_call(
        _mm_bias_kernel,
        out_shape=jax.ShapeDtypeStruct((M, N), jnp.float32),
        grid=(M // TM,),
        in_specs=[pl.BlockSpec((TM, K), lambda i: (i, 0)),
                  pl.BlockSpec((K, N), lambda i: (0, 0)),
                  pl.BlockSpec((1, N), lambda i: (0, 0))],
        out_specs=pl.BlockSpec((TM, N), lambda i: (i, 0)),
        compiler_params=_compiler_params(),
    )(x, w, b.reshape(1, N))


def ln_matmul(x, gamma, beta, w, b):
    M, E = x.shape
    N = w.shape[1]
    TM = _row_tile(M)
    return pl.pallas_call(
        _ln_mm_kernel,
        out_shape=jax.ShapeDtypeStruct((M, N), jnp.float32),
        grid=(M // TM,),
        in_specs=[pl.BlockSpec((TM, E), lambda i: (i, 0)),
                  pl.BlockSpec((1, E), lambda i: (0, 0)),
                  pl.BlockSpec((1, E), lambda i: (0, 0)),
                  pl.BlockSpec((E, N), lambda i: (0, 0)),
                  pl.BlockSpec((1, N), lambda i: (0, 0))],
        out_specs=pl.BlockSpec((TM, N), lambda i: (i, 0)),
        compiler_params=_compiler_params(),
    )(x, gamma.reshape(1, E), beta.reshape(1, E), w, b.reshape(1, N))


def encoder_block(x, blk, *, num_heads, scale):
    """One fused transformer encoder block over the whole (B, S, E) tensor."""
    B, S, E = x.shape
    F_ = blk["fc1_w"].shape[1]
    kernel = functools.partial(_encoder_block_kernel, num_heads=num_heads,
                               scale=scale)
    wspec = lambda shape: pl.BlockSpec(shape, lambda b: (0,) * len(shape))
    return pl.pallas_call(
        kernel,
        out_shape=jax.ShapeDtypeStruct((B, S, E), jnp.float32),
        grid=(B,),
        in_specs=[pl.BlockSpec((1, S, E), lambda b: (b, 0, 0)),
                  wspec((1, E)),            # ln1 gamma
                  wspec((1, E)),            # ln1 beta
                  wspec((E, 3 * E)),        # qkv weight
                  wspec((E, E)),            # projection weight
                  wspec((1, E)),            # projection bias
                  wspec((1, E)),            # ln2 gamma
                  wspec((1, E)),            # ln2 beta
                  wspec((E, F_)),           # fc1 weight
                  wspec((1, F_)),           # fc1 bias
                  wspec((F_, E)),           # fc2 weight
                  wspec((1, E))],           # fc2 bias
        out_specs=pl.BlockSpec((1, S, E), lambda b: (b, 0, 0)),
        compiler_params=_compiler_params(),
    )(x,
      blk["ln1_g"].reshape(1, E), blk["ln1_b"].reshape(1, E),
      blk["qkv_w"], blk["proj_w"], blk["proj_b"].reshape(1, E),
      blk["ln2_g"].reshape(1, E), blk["ln2_b"].reshape(1, E),
      blk["fc1_w"], blk["fc1_b"].reshape(1, F_),
      blk["fc2_w"], blk["fc2_b"].reshape(1, E))


# --------------------------------------------------------------------------
# Model wrapper (only reshape / concat / add glue stays in plain JAX)
# --------------------------------------------------------------------------

def vision_transformer_forward(x, params, cfg):
    B, C, H, W = x.shape
    ps = cfg["patch_size"]
    E = cfg["embedding_dim"]
    num_heads = cfg["num_heads"]

    h1, h2 = ps, H // ps
    w1, w2 = ps, W // ps
    # einops: 'b c (h1 h2) (w1 w2) -> b (h2 w2) (h1 w1 c)'
    patches = (x.reshape(B, C, h1, h2, w1, w2)
                .transpose(0, 3, 5, 2, 4, 1)
                .reshape(B, h2 * w2, h1 * w1 * C))
    N = h2 * w2
    P = h1 * w1 * C
    assert P == E, "patch_size**2 * in_channels must equal embedding_dim"

    # patch linear projection (row-tiled Pallas matmul)
    pe = matmul_bias(patches.reshape(B * N, P),
                     params["patch_w"], params["patch_b"]).reshape(B, N, E)

    # class token is concatenated un-projected and pos_enc lives in patch
    # space — exactly as written in the PyTorch module (valid because P == E).
    cls = jnp.broadcast_to(params["class_token"].reshape(1, 1, P), (B, 1, P))
    x_seq = jnp.concatenate([cls, pe], axis=1) + params["pos_enc"][None]
    scale = 1.0 / (E ** 0.5)   # module divides logits by embedding_dim ** 0.5

    for blk in params["blocks"]:
        # fully fused: LN1+QKV+MHA+proj+res -> LN2+fc1+GELU+fc2+res
        x_seq = encoder_block(x_seq, blk, num_heads=num_heads, scale=scale)

    # classification head: x[:, 0, :] -> LayerNorm -> Linear
    cls_tok = x_seq[:, 0, :]
    logits = ln_matmul(cls_tok, params["head_ln_g"], params["head_ln_b"],
                       params["head_w"], params["head_b"])
    return logits


# --------------------------------------------------------------------------
# Deterministic parameter initialization (synthetic, not a checkpoint)
# --------------------------------------------------------------------------

def init_params(key, cfg):
    E = cfg["embedding_dim"]
    M = cfg["mlp_dim"]
    Ccls = cfg["num_classes"]
    P = cfg["patch_size"] ** 2 * cfg["in_channels"]
    N = (cfg["img_size"] // cfg["patch_size"]) ** 2

    wdt = jnp.bfloat16   # matmul weights stored bf16: halves weight DMA, bf16 MXU

    def nrm(k, shape, std=0.02, dtype=jnp.float32):
        return (std * jax.random.normal(k, shape, dtype=jnp.float32)).astype(dtype)

    keys = iter(jax.random.split(key, 8 + 8 * cfg["encoder_depth"]))
    params = {
        "patch_w": nrm(next(keys), (P, E), dtype=wdt),        # stored (in, out)
        "patch_b": nrm(next(keys), (E,)),
        "class_token": jax.random.normal(next(keys), (P,), dtype=jnp.float32),
        "pos_enc": jax.random.normal(next(keys), (N + 1, P), dtype=jnp.float32),
        "head_ln_g": jnp.ones((E,), jnp.float32),
        "head_ln_b": jnp.zeros((E,), jnp.float32),
        "head_w": nrm(next(keys), (E, Ccls), dtype=wdt),
        "head_b": nrm(next(keys), (Ccls,)),
        "blocks": [],
    }
    for _ in range(cfg["encoder_depth"]):
        params["blocks"].append({
            "ln1_g": jnp.ones((E,), jnp.float32),
            "ln1_b": jnp.zeros((E,), jnp.float32),
            "qkv_w": nrm(next(keys), (E, 3 * E), dtype=wdt),   # bias-less qkv
            "proj_w": nrm(next(keys), (E, E), dtype=wdt),
            "proj_b": nrm(next(keys), (E,)),
            "ln2_g": jnp.ones((E,), jnp.float32),
            "ln2_b": jnp.zeros((E,), jnp.float32),
            "fc1_w": nrm(next(keys), (E, M), dtype=wdt),
            "fc1_b": nrm(next(keys), (M,)),
            "fc2_w": nrm(next(keys), (M, E), dtype=wdt),
            "fc2_b": nrm(next(keys), (E,)),
        })
    return params


# --------------------------------------------------------------------------
# Main
# --------------------------------------------------------------------------

if __name__ == "__main__":
    # small config consistent with the module's constraints
    cfg = dict(
        batch_size=2,
        in_channels=2,
        img_size=16,
        patch_size=4,          # 4*4*2 = 32 == embedding_dim (required by cat/+)
        embedding_dim=32,
        encoder_depth=2,
        num_heads=4,
        mlp_dim=64,
        drop_rate=0.1,         # TODO(synk): dropout is identity (eval mode)
        num_classes=10,
    )

    key = jax.random.PRNGKey(0)
    k_x, k_p = jax.random.split(key)
    x = jax.random.normal(
        k_x,
        (cfg["batch_size"], cfg["in_channels"], cfg["img_size"], cfg["img_size"]),
        dtype=jnp.float32,
    )
    params = init_params(k_p, cfg)

    fwd = jax.jit(functools.partial(vision_transformer_forward, cfg=cfg))
    logits = fwd(x, params)
    logits = jax.block_until_ready(logits)
    assert logits.shape == (cfg["batch_size"], cfg["num_classes"])
    assert bool(jnp.all(jnp.isfinite(logits)))
    print("KERNEL_OK")
</pallas_src>

<mosaic_0001>
module attributes {stable_mosaic.version = 11 : i64} {
  func.func @_mm_bias_kernel(%arg0: i32, %arg1: memref<32x32xf32, #tpu.memory_space<vmem>>, %arg2: memref<32x32xbf16, #tpu.memory_space<vmem>>, %arg3: memref<1x32xf32, #tpu.memory_space<vmem>>, %arg4: memref<32x32xf32, #tpu.memory_space<vmem>>) attributes {dimension_semantics = [#tpu.dimension_semantics<parallel>], iteration_bounds = array<i64: 1>, scalar_prefetch = 0 : i64, scratch_operands = 0 : i64, tpu.core_type = #tpu.core_type<tc>, window_params = [{transform_indices = @transform_0, window_bounds = array<i64: 32, 32>}, {pipeline_mode = #tpu.pipeline_mode<synchronous>, transform_indices = @transform_1, window_bounds = array<i64: 32, 32>}, {pipeline_mode = #tpu.pipeline_mode<synchronous>, transform_indices = @transform_2, window_bounds = array<i64: 1, 32>}, {transform_indices = @transform_3, window_bounds = array<i64: 32, 32>}]} {
    %c0 = arith.constant 0 : index
    %c0_0 = arith.constant 0 : index
    %0 = vector.load %arg1[%c0, %c0_0] : memref<32x32xf32, #tpu.memory_space<vmem>>, vector<32x32xf32>
    %1 = arith.truncf %0 : vector<32x32xf32> to vector<32x32xbf16>
    %c0_1 = arith.constant 0 : index
    %c0_2 = arith.constant 0 : index
    %2 = vector.load %arg2[%c0_1, %c0_2] : memref<32x32xbf16, #tpu.memory_space<vmem>>, vector<32x32xbf16>
    %cst = arith.constant dense<0.000000e+00> : vector<32x32xf32>
    %3 = tpu.matmul %1, %2, %cst {dimension_numbers = #tpu.dot_dimension_numbers<[1], [0], [0], [1], [0, 0, 1, 1], [], []>} : vector<32x32xbf16>, vector<32x32xbf16>, vector<32x32xf32> -> vector<32x32xf32>
    %c0_3 = arith.constant 0 : index
    %c0_4 = arith.constant 0 : index
    %4 = vector.load %arg3[%c0_3, %c0_4] : memref<1x32xf32, #tpu.memory_space<vmem>>, vector<1x32xf32>
    %5 = vector.broadcast %4 : vector<1x32xf32> to vector<32x32xf32>
    %6 = arith.addf %3, %5 : vector<32x32xf32>
    %c0_5 = arith.constant 0 : index
    %c0_6 = arith.constant 0 : index
    %7 = vector.load %arg4[%c0_5, %c0_6] : memref<32x32xf32, #tpu.memory_space<vmem>>, vector<32x32xf32>
    tpu.vector_store %arg4[%c0_5, %c0_6], %6 {strides = array<i32>} : memref<32x32xf32, #tpu.memory_space<vmem>>, vector<32x32xf32>,
    return
  }
  func.func @transform_0(%arg0: i32) -> (i32, i32) {
    %c0_i32 = arith.constant 0 : i32
    %c0_i32_0 = arith.constant 0 : i32
    return %arg0, %c0_i32 : i32, i32
  }
  func.func @transform_1(%arg0: i32) -> (i32, i32) {
    %c0_i32 = arith.constant 0 : i32
    %c0_i32_0 = arith.constant 0 : i32
    %c0_i32_1 = arith.constant 0 : i32
    return %c0_i32, %c0_i32_0 : i32, i32
  }
  func.func @transform_2(%arg0: i32) -> (i32, i32) {
    %c0_i32 = arith.constant 0 : i32
    %c0_i32_0 = arith.constant 0 : i32
    %c0_i32_1 = arith.constant 0 : i32
    return %c0_i32, %c0_i32_0 : i32, i32
  }
  func.func @transform_3(%arg0: i32) -> (i32, i32) {
    %c0_i32 = arith.constant 0 : i32
    %c0_i32_0 = arith.constant 0 : i32
    return %arg0, %c0_i32 : i32, i32
  }
}

module attributes {stable_mosaic.version = 11 : i64} {
  func.func @_ln_mm_kernel(%arg0: i32, %arg1: memref<2x32xf32, #tpu.memory_space<vmem>>, %arg2: memref<1x32xf32, #tpu.memory_space<vmem>>, %arg3: memref<1x32xf32, #tpu.memory_space<vmem>>, %arg4: memref<32x10xbf16, #tpu.memory_space<vmem>>, %arg5: memref<1x10xf32, #tpu.memory_space<vmem>>, %arg6: memref<2x10xf32, #tpu.memory_space<vmem>>) attributes {dimension_semantics = [#tpu.dimension_semantics<parallel>], iteration_bounds = array<i64: 1>, scalar_prefetch = 0 : i64, scratch_operands = 0 : i64, tpu.core_type = #tpu.core_type<tc>, window_params = [{transform_indices = @transform_0, window_bounds = array<i64: 2, 32>}, {pipeline_mode = #tpu.pipeline_mode<synchronous>, transform_indices = @transform_1, window_bounds = array<i64: 1, 32>}, {pipeline_mode = #tpu.pipeline_mode<synchronous>, transform_indices = @transform_2, window_bounds = array<i64: 1, 32>}, {pipeline_mode = #tpu.pipeline_mode<synchronous>, transform_indices = @transform_3, window_bounds = array<i64: 32, 10>}, {pipeline_mode = #tpu.pipeline_mode<synchronous>, transform_indices = @transform_4, window_bounds = array<i64: 1, 10>}, {transform_indices = @transform_5, window_bounds = array<i64: 2, 10>}]} {
    %c0 = arith.constant 0 : index
    %c0_0 = arith.constant 0 : index
    %0 = vector.load %arg1[%c0, %c0_0] : memref<2x32xf32, #tpu.memory_space<vmem>>, vector<2x32xf32>
    %c0_1 = arith.constant 0 : index
    %c0_2 = arith.constant 0 : index
    %1 = vector.load %arg2[%c0_1, %c0_2] : memref<1x32xf32, #tpu.memory_space<vmem>>, vector<1x32xf32>
    %c0_3 = arith.constant 0 : index
    %c0_4 = arith.constant 0 : index
    %2 = vector.load %arg3[%c0_3, %c0_4] : memref<1x32xf32, #tpu.memory_space<vmem>>, vector<1x32xf32>
    %cst = arith.constant dense<0.000000e+00> : vector<2xf32>
    %3 = vector.multi_reduction <add>, %0, %cst [1] : vector<2x32xf32> to vector<2xf32>
    %4 = vector.shape_cast %3 : vector<2xf32> to vector<2x1xf32>
    %cst_5 = arith.constant 3.200000e+01 : f32
    %5 = vector.broadcast %cst_5 : f32 to vector<2x1xf32>
    %6 = arith.divf %4, %5 : vector<2x1xf32>
    %7 = vector.broadcast %6 : vector<2x1xf32> to vector<2x32xf32>
    %8 = arith.subf %0, %7 : vector<2x32xf32>
    %9 = arith.mulf %8, %8 : vector<2x32xf32>
    %cst_6 = arith.constant dense<0.000000e+00> : vector<2xf32>
    %10 = vector.multi_reduction <add>, %9, %cst_6 [1] : vector<2x32xf32> to vector<2xf32>
    %11 = vector.shape_cast %10 : vector<2xf32> to vector<2x1xf32>
    %cst_7 = arith.constant 3.200000e+01 : f32
    %12 = vector.broadcast %cst_7 : f32 to vector<2x1xf32>
    %13 = arith.divf %11, %12 : vector<2x1xf32>
    %14 = vector.broadcast %6 : vector<2x1xf32> to vector<2x32xf32>
    %15 = arith.subf %0, %14 : vector<2x32xf32>
    %cst_8 = arith.constant 9.99999974E-6 : f32
    %16 = vector.broadcast %cst_8 : f32 to vector<2x1xf32>
    %17 = arith.addf %13, %16 : vector<2x1xf32>
    %18 = math.rsqrt %17 : vector<2x1xf32>
    %19 = vector.broadcast %18 : vector<2x1xf32> to vector<2x32xf32>
    %20 = arith.mulf %15, %19 : vector<2x32xf32>
    %21 = vector.broadcast %1 : vector<1x32xf32> to vector<2x32xf32>
    %22 = arith.mulf %20, %21 : vector<2x32xf32>
    %23 = vector.broadcast %2 : vector<1x32xf32> to vector<2x32xf32>
    %24 = arith.addf %22, %23 : vector<2x32xf32>
    %25 = arith.truncf %24 : vector<2x32xf32> to vector<2x32xbf16>
    %c0_9 = arith.constant 0 : index
    %c0_10 = arith.constant 0 : index
    %26 = vector.load %arg4[%c0_9, %c0_10] : memref<32x10xbf16, #tpu.memory_space<vmem>>, vector<32x10xbf16>
    %cst_11 = arith.constant dense<0.000000e+00> : vector<2x10xf32>
    %27 = tpu.matmul %25, %26, %cst_11 {dimension_numbers = #tpu.dot_dimension_numbers<[1], [0], [0], [1], [0, 0, 1, 1], [], []>} : vector<2x32xbf16>, vector<32x10xbf16>, vector<2x10xf32> -> vector<2x10xf32>
    %c0_12 = arith.constant 0 : index
    %c0_13 = arith.constant 0 : index
    %28 = vector.load %arg5[%c0_12, %c0_13] : memref<1x10xf32, #tpu.memory_space<vmem>>, vector<1x10xf32>
    %29 = vector.broadcast %28 : vector<1x10xf32> to vector<2x10xf32>
    %30 = arith.addf %27, %29 : vector<2x10xf32>
    %c0_14 = arith.constant 0 : index
    %c0_15 = arith.constant 0 : index
    %31 = vector.load %arg6[%c0_14, %c0_15] : memref<2x10xf32, #tpu.memory_space<vmem>>, vector<2x10xf32>
    tpu.vector_store %arg6[%c0_14, %c0_15], %30 {strides = array<i32>} : memref<2x10xf32, #tpu.memory_space<vmem>>, vector<2x10xf32>,
    return
  }
  func.func @transform_0(%arg0: i32) -> (i32, i32) {
    %c0_i32 = arith.constant 0 : i32
    %c0_i32_0 = arith.constant 0 : i32
    return %arg0, %c0_i32 : i32, i32
  }
  func.func @transform_1(%arg0: i32) -> (i32, i32) {
    %c0_i32 = arith.constant 0 : i32
    %c0_i32_0 = arith.constant 0 : i32
    %c0_i32_1 = arith.constant 0 : i32
    return %c0_i32, %c0_i32_0 : i32, i32
  }
  func.func @transform_2(%arg0: i32) -> (i32, i32) {
    %c0_i32 = arith.constant 0 : i32
    %c0_i32_0 = arith.constant 0 : i32
    %c0_i32_1 = arith.constant 0 : i32
    return %c0_i32, %c0_i32_0 : i32, i32
  }
  func.func @transform_3(%arg0: i32) -> (i32, i32) {
    %c0_i32 = arith.constant 0 : i32
    %c0_i32_0 = arith.constant 0 : i32
    %c0_i32_1 = arith.constant 0 : i32
    return %c0_i32, %c0_i32_0 : i32, i32
  }
  func.func @transform_4(%arg0: i32) -> (i32, i32) {
    %c0_i32 = arith.constant 0 : i32
    %c0_i32_0 = arith.constant 0 : i32
    %c0_i32_1 = arith.constant 0 : i32
    return %c0_i32, %c0_i32_0 : i32, i32
  }
  func.func @transform_5(%arg0: i32) -> (i32, i32) {
    %c0_i32 = arith.constant 0 : i32
    %c0_i32_0 = arith.constant 0 : i32
    return %arg0, %c0_i32 : i32, i32
  }
}

module attributes {stable_mosaic.version = 11 : i64} {
  func.func @_encoder_block_kernel(%arg0: i32, %arg1: memref<1x17x32xf32, #tpu.memory_space<vmem>>, %arg2: memref<1x32xf32, #tpu.memory_space<vmem>>, %arg3: memref<1x32xf32, #tpu.memory_space<vmem>>, %arg4: memref<32x96xbf16, #tpu.memory_space<vmem>>, %arg5: memref<32x32xbf16, #tpu.memory_space<vmem>>, %arg6: memref<1x32xf32, #tpu.memory_space<vmem>>, %arg7: memref<1x32xf32, #tpu.memory_space<vmem>>, %arg8: memref<1x32xf32, #tpu.memory_space<vmem>>, %arg9: memref<32x64xbf16, #tpu.memory_space<vmem>>, %arg10: memref<1x64xf32, #tpu.memory_space<vmem>>, %arg11: memref<64x32xbf16, #tpu.memory_space<vmem>>, %arg12: memref<1x32xf32, #tpu.memory_space<vmem>>, %arg13: memref<1x17x32xf32, #tpu.memory_space<vmem>>) attributes {dimension_semantics = [#tpu.dimension_semantics<parallel>], iteration_bounds = array<i64: 2>, scalar_prefetch = 0 : i64, scratch_operands = 0 : i64, tpu.core_type = #tpu.core_type<tc>, window_params = [{transform_indices = @transform_0, window_bounds = array<i64: 1, 17, 32>}, {pipeline_mode = #tpu.pipeline_mode<synchronous>, transform_indices = @transform_1, window_bounds = array<i64: 1, 32>}, {pipeline_mode = #tpu.pipeline_mode<synchronous>, transform_indices = @transform_2, window_bounds = array<i64: 1, 32>}, {pipeline_mode = #tpu.pipeline_mode<synchronous>, transform_indices = @transform_3, window_bounds = array<i64: 32, 96>}, {pipeline_mode = #tpu.pipeline_mode<synchronous>, transform_indices = @transform_4, window_bounds = array<i64: 32, 32>}, {pipeline_mode = #tpu.pipeline_mode<synchronous>, transform_indices = @transform_5, window_bounds = array<i64: 1, 32>}, {pipeline_mode = #tpu.pipeline_mode<synchronous>, transform_indices = @transform_6, window_bounds = array<i64: 1, 32>}, {pipeline_mode = #tpu.pipeline_mode<synchronous>, transform_indices = @transform_7, window_bounds = array<i64: 1, 32>}, {pipeline_mode = #tpu.pipeline_mode<synchronous>, transform_indices = @transform_8, window_bounds = array<i64: 32, 64>}, {pipeline_mode = #tpu.pipeline_mode<synchronous>, transform_indices = @transform_9, window_bounds = array<i64: 1, 64>}, {pipeline_mode = #tpu.pipeline_mode<synchronous>, transform_indices = @transform_10, window_bounds = array<i64: 64, 32>}, {pipeline_mode = #tpu.pipeline_mode<synchronous>, transform_indices = @transform_11, window_bounds = array<i64: 1, 32>}, {transform_indices = @transform_12, window_bounds = array<i64: 1, 17, 32>}]} {
    %c0 = arith.constant 0 : index
    %c0_0 = arith.constant 0 : index
    %c0_1 = arith.constant 0 : index
    %0 = vector.load %arg1[%c0, %c0_0, %c0_1] : memref<1x17x32xf32, #tpu.memory_space<vmem>>, vector<1x17x32xf32>
    %1 = vector.shape_cast %0 : vector<1x17x32xf32> to vector<17x32xf32>
    %c0_2 = arith.constant 0 : index
    %c0_3 = arith.constant 0 : index
    %2 = vector.load %arg2[%c0_2, %c0_3] : memref<1x32xf32, #tpu.memory_space<vmem>>, vector<1x32xf32>
    %c0_4 = arith.constant 0 : index
    %c0_5 = arith.constant 0 : index
    %3 = vector.load %arg3[%c0_4, %c0_5] : memref<1x32xf32, #tpu.memory_space<vmem>>, vector<1x32xf32>
    %cst = arith.constant dense<0.000000e+00> : vector<17xf32>
    %4 = vector.multi_reduction <add>, %1, %cst [1] : vector<17x32xf32> to vector<17xf32>
    %5 = vector.shape_cast %4 : vector<17xf32> to vector<17x1xf32>
    %cst_6 = arith.constant 3.200000e+01 : f32
    %6 = vector.broadcast %cst_6 : f32 to vector<17x1xf32>
    %7 = arith.divf %5, %6 : vector<17x1xf32>
    %8 = vector.broadcast %7 : vector<17x1xf32> to vector<17x32xf32>
    %9 = arith.subf %1, %8 : vector<17x32xf32>
    %10 = arith.mulf %9, %9 : vector<17x32xf32>
    %cst_7 = arith.constant dense<0.000000e+00> : vector<17xf32>
    %11 = vector.multi_reduction <add>, %10, %cst_7 [1] : vector<17x32xf32> to vector<17xf32>
    %12 = vector.shape_cast %11 : vector<17xf32> to vector<17x1xf32>
    %cst_8 = arith.constant 3.200000e+01 : f32
    %13 = vector.broadcast %cst_8 : f32 to vector<17x1xf32>
    %14 = arith.divf %12, %13 : vector<17x1xf32>
    %15 = vector.broadcast %7 : vector<17x1xf32> to vector<17x32xf32>
    %16 = arith.subf %1, %15 : vector<17x32xf32>
    %cst_9 = arith.constant 9.99999974E-6 : f32
    %17 = vector.broadcast %cst_9 : f32 to vector<17x1xf32>
    %18 = arith.addf %14, %17 : vector<17x1xf32>
    %19 = math.rsqrt %18 : vector<17x1xf32>
    %20 = vector.broadcast %19 : vector<17x1xf32> to vector<17x32xf32>
    %21 = arith.mulf %16, %20 : vector<17x32xf32>
    %22 = vector.broadcast %2 : vector<1x32xf32> to vector<17x32xf32>
    %23 = arith.mulf %21, %22 : vector<17x32xf32>
    %24 = vector.broadcast %3 : vector<1x32xf32> to vector<17x32xf32>
    %25 = arith.addf %23, %24 : vector<17x32xf32>
    %26 = arith.truncf %25 : vector<17x32xf32> to vector<17x32xbf16>
    %c0_10 = arith.constant 0 : index
    %c0_11 = arith.constant 0 : index
    %27 = vector.load %arg4[%c0_10, %c0_11] : memref<32x96xbf16, #tpu.memory_space<vmem>>, vector<32x96xbf16>
    %cst_12 = arith.constant dense<0.000000e+00> : vector<17x96xf32>
    %28 = tpu.matmul %26, %27, %cst_12 {dimension_numbers = #tpu.dot_dimension_numbers<[1], [0], [0], [1], [0, 0, 1, 1], [], []>} : vector<17x32xbf16>, vector<32x96xbf16>, vector<17x96xf32> -> vector<17x96xf32>
    %c0_13 = arith.constant 0 : index
    %c0_14 = arith.constant 0 : index
    %29 = vector.load %arg5[%c0_13, %c0_14] : memref<32x32xbf16, #tpu.memory_space<vmem>>, vector<32x32xbf16>
    %cst_15 = arith.constant 0.000000e+00 : f32
    %30 = vector.broadcast %cst_15 : f32 to vector<17x32xf32>
    %31 = vector.extract_strided_slice %28 {offsets = [0, 0], sizes = [17, 8], strides = [1, 1]} : vector<17x96xf32> to vector<17x8xf32>
    %cst_16 = arith.constant 0.176776692 : f32
    %32 = vector.broadcast %cst_16 : f32 to vector<17x8xf32>
    %33 = arith.mulf %31, %32 : vector<17x8xf32>
    %34 = arith.truncf %33 : vector<17x8xf32> to vector<17x8xbf16>
    %35 = vector.extract_strided_slice %28 {offsets = [0, 32], sizes = [17, 8], strides = [1, 1]} : vector<17x96xf32> to vector<17x8xf32>
    %36 = arith.truncf %35 : vector<17x8xf32> to vector<17x8xbf16>
    %37 = vector.extract_strided_slice %28 {offsets = [0, 64], sizes = [17, 8], strides = [1, 1]} : vector<17x96xf32> to vector<17x8xf32>
    %38 = arith.truncf %37 : vector<17x8xf32> to vector<17x8xbf16>
    %cst_17 = arith.constant dense<0.000000e+00> : vector<17x17xf32>
    %39 = tpu.matmul %34, %36, %cst_17 {dimension_numbers = #tpu.dot_dimension_numbers<[1], [1], [0], [0], [0, 0, 1, 0], [], []>} : vector<17x8xbf16>, vector<17x8xbf16>, vector<17x17xf32> -> vector<17x17xf32>
    %cst_18 = arith.constant dense<0xFF800000> : vector<17xf32>
    %40 = vector.multi_reduction <maximumf>, %39, %cst_18 [1] : vector<17x17xf32> to vector<17xf32>
    %41 = vector.shape_cast %40 : vector<17xf32> to vector<17x1xf32>
    %42 = vector.broadcast %41 : vector<17x1xf32> to vector<17x17xf32>
    %43 = arith.subf %39, %42 : vector<17x17xf32>
    %44 = math.exp %43 : vector<17x17xf32>
    %cst_19 = arith.constant dense<0.000000e+00> : vector<17xf32>
    %45 = vector.multi_reduction <add>, %44, %cst_19 [1] : vector<17x17xf32> to vector<17xf32>
    %46 = vector.shape_cast %45 : vector<17xf32> to vector<17x1xf32>
    %47 = tpu.reciprocal %46 {approx = true} : vector<17x1xf32> -> vector<17x1xf32>
    %48 = vector.broadcast %47 : vector<17x1xf32> to vector<17x17xf32>
    %49 = arith.mulf %44, %48 : vector<17x17xf32>
    %50 = arith.truncf %49 : vector<17x17xf32> to vector<17x17xbf16>
    %cst_20 = arith.constant dense<0.000000e+00> : vector<17x8xf32>
    %51 = tpu.matmul %50, %38, %cst_20 {dimension_numbers = #tpu.dot_dimension_numbers<[1], [0], [0], [1], [0, 0, 1, 1], [], []>} : vector<17x17xbf16>, vector<17x8xbf16>, vector<17x8xf32> -> vector<17x8xf32>
    %52 = arith.truncf %51 : vector<17x8xf32> to vector<17x8xbf16>
    %53 = vector.extract_strided_slice %29 {offsets = [0, 0], sizes = [8, 32], strides = [1, 1]} : vector<32x32xbf16> to vector<8x32xbf16>
    %cst_21 = arith.constant dense<0.000000e+00> : vector<17x32xf32>
    %54 = tpu.matmul %52, %53, %cst_21 {dimension_numbers = #tpu.dot_dimension_numbers<[1], [0], [0], [1], [0, 0, 1, 1], [], []>} : vector<17x8xbf16>, vector<8x32xbf16>, vector<17x32xf32> -> vector<17x32xf32>
    %55 = arith.addf %30, %54 : vector<17x32xf32>
    %56 = vector.extract_strided_slice %28 {offsets = [0, 8], sizes = [17, 8], strides = [1, 1]} : vector<17x96xf32> to vector<17x8xf32>
    %cst_22 = arith.constant 0.176776692 : f32
    %57 = vector.broadcast %cst_22 : f32 to vector<17x8xf32>
    %58 = arith.mulf %56, %57 : vector<17x8xf32>
    %59 = arith.truncf %58 : vector<17x8xf32> to vector<17x8xbf16>
    %60 = vector.extract_strided_slice %28 {offsets = [0, 40], sizes = [17, 8], strides = [1, 1]} : vector<17x96xf32> to vector<17x8xf32>
    %61 = arith.truncf %60 : vector<17x8xf32> to vector<17x8xbf16>
    %62 = vector.extract_strided_slice %28 {offsets = [0, 72], sizes = [17, 8], strides = [1, 1]} : vector<17x96xf32> to vector<17x8xf32>
    %63 = arith.truncf %62 : vector<17x8xf32> to vector<17x8xbf16>
    %cst_23 = arith.constant dense<0.000000e+00> : vector<17x17xf32>
    %64 = tpu.matmul %59, %61, %cst_23 {dimension_numbers = #tpu.dot_dimension_numbers<[1], [1], [0], [0], [0, 0, 1, 0], [], []>} : vector<17x8xbf16>, vector<17x8xbf16>, vector<17x17xf32> -> vector<17x17xf32>
    %cst_24 = arith.constant dense<0xFF800000> : vector<17xf32>
    %65 = vector.multi_reduction <maximumf>, %64, %cst_24 [1] : vector<17x17xf32> to vector<17xf32>
    %66 = vector.shape_cast %65 : vector<17xf32> to vector<17x1xf32>
    %67 = vector.broadcast %66 : vector<17x1xf32> to vector<17x17xf32>
    %68 = arith.subf %64, %67 : vector<17x17xf32>
    %69 = math.exp %68 : vector<17x17xf32>
    %cst_25 = arith.constant dense<0.000000e+00> : vector<17xf32>
    %70 = vector.multi_reduction <add>, %69, %cst_25 [1] : vector<17x17xf32> to vector<17xf32>
    %71 = vector.shape_cast %70 : vector<17xf32> to vector<17x1xf32>
    %72 = tpu.reciprocal %71 {approx = true} : vector<17x1xf32> -> vector<17x1xf32>
    %73 = vector.broadcast %72 : vector<17x1xf32> to vector<17x17xf32>
    %74 = arith.mulf %69, %73 : vector<17x17xf32>
    %75 = arith.truncf %74 : vector<17x17xf32> to vector<17x17xbf16>
    %cst_26 = arith.constant dense<0.000000e+00> : vector<17x8xf32>
    %76 = tpu.matmul %75, %63, %cst_26 {dimension_numbers = #tpu.dot_dimension_numbers<[1], [0], [0], [1], [0, 0, 1, 1], [], []>} : vector<17x17xbf16>, vector<17x8xbf16>, vector<17x8xf32> -> vector<17x8xf32>
    %77 = arith.truncf %76 : vector<17x8xf32> to vector<17x8xbf16>
    %78 = vector.extract_strided_slice %29 {offsets = [8, 0], sizes = [8, 32], strides = [1, 1]} : vector<32x32xbf16> to vector<8x32xbf16>
    %cst_27 = arith.constant dense<0.000000e+00> : vector<17x32xf32>
    %79 = tpu.matmul %77, %78, %cst_27 {dimension_numbers = #tpu.dot_dimension_numbers<[1], [0], [0], [1], [0, 0, 1, 1], [], []>} : vector<17x8xbf16>, vector<8x32xbf16>, vector<17x32xf32> -> vector<17x32xf32>
    %80 = arith.addf %55, %79 : vector<17x32xf32>
    %81 = vector.extract_strided_slice %28 {offsets = [0, 16], sizes = [17, 8], strides = [1, 1]} : vector<17x96xf32> to vector<17x8xf32>
    %cst_28 = arith.constant 0.176776692 : f32
    %82 = vector.broadcast %cst_28 : f32 to vector<17x8xf32>
    %83 = arith.mulf %81, %82 : vector<17x8xf32>
    %84 = arith.truncf %83 : vector<17x8xf32> to vector<17x8xbf16>
    %85 = vector.extract_strided_slice %28 {offsets = [0, 48], sizes = [17, 8], strides = [1, 1]} : vector<17x96xf32> to vector<17x8xf32>
    %86 = arith.truncf %85 : vector<17x8xf32> to vector<17x8xbf16>
    %87 = vector.extract_strided_slice %28 {offsets = [0, 80], sizes = [17, 8], strides = [1, 1]} : vector<17x96xf32> to vector<17x8xf32>
    %88 = arith.truncf %87 : vector<17x8xf32> to vector<17x8xbf16>
    %cst_29 = arith.constant dense<0.000000e+00> : vector<17x17xf32>
    %89 = tpu.matmul %84, %86, %cst_29 {dimension_numbers = #tpu.dot_dimension_numbers<[1], [1], [0], [0], [0, 0, 1, 0], [], []>} : vector<17x8xbf16>, vector<17x8xbf16>, vector<17x17xf32> -> vector<17x17xf32>
    %cst_30 = arith.constant dense<0xFF800000> : vector<17xf32>
    %90 = vector.multi_reduction <maximumf>, %89, %cst_30 [1] : vector<17x17xf32> to vector<17xf32>
    %91 = vector.shape_cast %90 : vector<17xf32> to vector<17x1xf32>
    %92 = vector.broadcast %91 : vector<17x1xf32> to vector<17x17xf32>
    %93 = arith.subf %89, %92 : vector<17x17xf32>
    %94 = math.exp %93 : vector<17x17xf32>
    %cst_31 = arith.constant dense<0.000000e+00> : vector<17xf32>
    %95 = vector.multi_reduction <add>, %94, %cst_31 [1] : vector<17x17xf32> to vector<17xf32>
    %96 = vector.shape_cast %95 : vector<17xf32> to vector<17x1xf32>
    %97 = tpu.reciprocal %96 {approx = true} : vector<17x1xf32> -> vector<17x1xf32>
    %98 = vector.broadcast %97 : vector<17x1xf32> to vector<17x17xf32>
    %99 = arith.mulf %94, %98 : vector<17x17xf32>
    %100 = arith.truncf %99 : vector<17x17xf32> to vector<17x17xbf16>
    %cst_32 = arith.constant dense<0.000000e+00> : vector<17x8xf32>
    %101 = tpu.matmul %100, %88, %cst_32 {dimension_numbers = #tpu.dot_dimension_numbers<[1], [0], [0], [1], [0, 0, 1, 1], [], []>} : vector<17x17xbf16>, vector<17x8xbf16>, vector<17x8xf32> -> vector<17x8xf32>
    %102 = arith.truncf %101 : vector<17x8xf32> to vector<17x8xbf16>
    %103 = vector.extract_strided_slice %29 {offsets = [16, 0], sizes = [8, 32], strides = [1, 1]} : vector<32x32xbf16> to vector<8x32xbf16>
    %cst_33 = arith.constant dense<0.000000e+00> : vector<17x32xf32>
    %104 = tpu.matmul %102, %103, %cst_33 {dimension_numbers = #tpu.dot_dimension_numbers<[1], [0], [0], [1], [0, 0, 1, 1], [], []>} : vector<17x8xbf16>, vector<8x32xbf16>, vector<17x32xf32> -> vector<17x32xf32>
    %105 = arith.addf %80, %104 : vector<17x32xf32>
    %106 = vector.extract_strided_slice %28 {offsets = [0, 24], sizes = [17, 8], strides = [1, 1]} : vector<17x96xf32> to vector<17x8xf32>
    %cst_34 = arith.constant 0.176776692 : f32
    %107 = vector.broadcast %cst_34 : f32 to vector<17x8xf32>
    %108 = arith.mulf %106, %107 : vector<17x8xf32>
    %109 = arith.truncf %108 : vector<17x8xf32> to vector<17x8xbf16>
    %110 = vector.extract_strided_slice %28 {offsets = [0, 56], sizes = [17, 8], strides = [1, 1]} : vector<17x96xf32> to vector<17x8xf32>
    %111 = arith.truncf %110 : vector<17x8xf32> to vector<17x8xbf16>
    %112 = vector.extract_strided_slice %28 {offsets = [0, 88], sizes = [17, 8], strides = [1, 1]} : vector<17x96xf32> to vector<17x8xf32>
    %113 = arith.truncf %112 : vector<17x8xf32> to vector<17x8xbf16>
    %cst_35 = arith.constant dense<0.000000e+00> : vector<17x17xf32>
    %114 = tpu.matmul %109, %111, %cst_35 {dimension_numbers = #tpu.dot_dimension_numbers<[1], [1], [0], [0], [0, 0, 1, 0], [], []>} : vector<17x8xbf16>, vector<17x8xbf16>, vector<17x17xf32> -> vector<17x17xf32>
    %cst_36 = arith.constant dense<0xFF800000> : vector<17xf32>
    %115 = vector.multi_reduction <maximumf>, %114, %cst_36 [1] : vector<17x17xf32> to vector<17xf32>
    %116 = vector.shape_cast %115 : vector<17xf32> to vector<17x1xf32>
    %117 = vector.broadcast %116 : vector<17x1xf32> to vector<17x17xf32>
    %118 = arith.subf %114, %117 : vector<17x17xf32>
    %119 = math.exp %118 : vector<17x17xf32>
    %cst_37 = arith.constant dense<0.000000e+00> : vector<17xf32>
    %120 = vector.multi_reduction <add>, %119, %cst_37 [1] : vector<17x17xf32> to vector<17xf32>
    %121 = vector.shape_cast %120 : vector<17xf32> to vector<17x1xf32>
    %122 = tpu.reciprocal %121 {approx = true} : vector<17x1xf32> -> vector<17x1xf32>
    %123 = vector.broadcast %122 : vector<17x1xf32> to vector<17x17xf32>
    %124 = arith.mulf %119, %123 : vector<17x17xf32>
    %125 = arith.truncf %124 : vector<17x17xf32> to vector<17x17xbf16>
    %cst_38 = arith.constant dense<0.000000e+00> : vector<17x8xf32>
    %126 = tpu.matmul %125, %113, %cst_38 {dimension_numbers = #tpu.dot_dimension_numbers<[1], [0], [0], [1], [0, 0, 1, 1], [], []>} : vector<17x17xbf16>, vector<17x8xbf16>, vector<17x8xf32> -> vector<17x8xf32>
    %127 = arith.truncf %126 : vector<17x8xf32> to vector<17x8xbf16>
    %128 = vector.extract_strided_slice %29 {offsets = [24, 0], sizes = [8, 32], strides = [1, 1]} : vector<32x32xbf16> to vector<8x32xbf16>
    %cst_39 = arith.constant dense<0.000000e+00> : vector<17x32xf32>
    %129 = tpu.matmul %127, %128, %cst_39 {dimension_numbers = #tpu.dot_dimension_numbers<[1], [0], [0], [1], [0, 0, 1, 1], [], []>} : vector<17x8xbf16>, vector<8x32xbf16>, vector<17x32xf32> -> vector<17x32xf32>
    %130 = arith.addf %105, %129 : vector<17x32xf32>
    %c0_40 = arith.constant 0 : index
    %c0_41 = arith.constant 0 : index
    %131 = vector.load %arg6[%c0_40, %c0_41] : memref<1x32xf32, #tpu.memory_space<vmem>>, vector<1x32xf32>
    %132 = vector.broadcast %131 : vector<1x32xf32> to vector<17x32xf32>
    %133 = arith.addf %130, %132 : vector<17x32xf32>
    %134 = arith.addf %133, %1 : vector<17x32xf32>
    %c0_42 = arith.constant 0 : index
    %c0_43 = arith.constant 0 : index
    %135 = vector.load %arg7[%c0_42, %c0_43] : memref<1x32xf32, #tpu.memory_space<vmem>>, vector<1x32xf32>
    %c0_44 = arith.constant 0 : index
    %c0_45 = arith.constant 0 : index
    %136 = vector.load %arg8[%c0_44, %c0_45] : memref<1x32xf32, #tpu.memory_space<vmem>>, vector<1x32xf32>
    %cst_46 = arith.constant dense<0.000000e+00> : vector<17xf32>
    %137 = vector.multi_reduction <add>, %134, %cst_46 [1] : vector<17x32xf32> to vector<17xf32>
    %138 = vector.shape_cast %137 : vector<17xf32> to vector<17x1xf32>
    %cst_47 = arith.constant 3.200000e+01 : f32
    %139 = vector.broadcast %cst_47 : f32 to vector<17x1xf32>
    %140 = arith.divf %138, %139 : vector<17x1xf32>
    %141 = vector.broadcast %140 : vector<17x1xf32> to vector<17x32xf32>
    %142 = arith.subf %134, %141 : vector<17x32xf32>
    %143 = arith.mulf %142, %142 : vector<17x32xf32>
    %cst_48 = arith.constant dense<0.000000e+00> : vector<17xf32>
    %144 = vector.multi_reduction <add>, %143, %cst_48 [1] : vector<17x32xf32> to vector<17xf32>
    %145 = vector.shape_cast %144 : vector<17xf32> to vector<17x1xf32>
    %cst_49 = arith.constant 3.200000e+01 : f32
    %146 = vector.broadcast %cst_49 : f32 to vector<17x1xf32>
    %147 = arith.divf %145, %146 : vector<17x1xf32>
    %148 = vector.broadcast %140 : vector<17x1xf32> to vector<17x32xf32>
    %149 = arith.subf %134, %148 : vector<17x32xf32>
    %cst_50 = arith.constant 9.99999974E-6 : f32
    %150 = vector.broadcast %cst_50 : f32 to vector<17x1xf32>
    %151 = arith.addf %147, %150 : vector<17x1xf32>
    %152 = math.rsqrt %151 : vector<17x1xf32>
    %153 = vector.broadcast %152 : vector<17x1xf32> to vector<17x32xf32>
    %154 = arith.mulf %149, %153 : vector<17x32xf32>
    %155 = vector.broadcast %135 : vector<1x32xf32> to vector<17x32xf32>
    %156 = arith.mulf %154, %155 : vector<17x32xf32>
    %157 = vector.broadcast %136 : vector<1x32xf32> to vector<17x32xf32>
    %158 = arith.addf %156, %157 : vector<17x32xf32>
    %159 = arith.truncf %158 : vector<17x32xf32> to vector<17x32xbf16>
    %c0_51 = arith.constant 0 : index
    %c0_52 = arith.constant 0 : index
    %160 = vector.load %arg9[%c0_51, %c0_52] : memref<32x64xbf16, #tpu.memory_space<vmem>>, vector<32x64xbf16>
    %cst_53 = arith.constant dense<0.000000e+00> : vector<17x64xf32>
    %161 = tpu.matmul %159, %160, %cst_53 {dimension_numbers = #tpu.dot_dimension_numbers<[1], [0], [0], [1], [0, 0, 1, 1], [], []>} : vector<17x32xbf16>, vector<32x64xbf16>, vector<17x64xf32> -> vector<17x64xf32>
    %c0_54 = arith.constant 0 : index
    %c0_55 = arith.constant 0 : index
    %162 = vector.load %arg10[%c0_54, %c0_55] : memref<1x64xf32, #tpu.memory_space<vmem>>, vector<1x64xf32>
    %163 = vector.broadcast %162 : vector<1x64xf32> to vector<17x64xf32>
    %164 = arith.addf %161, %163 : vector<17x64xf32>
    %cst_56 = arith.constant 5.000000e-01 : f32
    %165 = vector.broadcast %cst_56 : f32 to vector<17x64xf32>
    %166 = arith.mulf %165, %164 : vector<17x64xf32>
    %cst_57 = arith.constant 0.707106769 : f32
    %167 = vector.broadcast %cst_57 : f32 to vector<17x64xf32>
    %168 = arith.mulf %164, %167 : vector<17x64xf32>
    %169 = math.erf %168 : vector<17x64xf32>
    %cst_58 = arith.constant 1.000000e+00 : f32
    %170 = vector.broadcast %cst_58 : f32 to vector<17x64xf32>
    %171 = arith.addf %170, %169 : vector<17x64xf32>
    %172 = arith.mulf %166, %171 : vector<17x64xf32>
    %173 = arith.truncf %172 : vector<17x64xf32> to vector<17x64xbf16>
    %c0_59 = arith.constant 0 : index
    %c0_60 = arith.constant 0 : index
    %174 = vector.load %arg11[%c0_59, %c0_60] : memref<64x32xbf16, #tpu.memory_space<vmem>>, vector<64x32xbf16>
    %cst_61 = arith.constant dense<0.000000e+00> : vector<17x32xf32>
    %175 = tpu.matmul %173, %174, %cst_61 {dimension_numbers = #tpu.dot_dimension_numbers<[1], [0], [0], [1], [0, 0, 1, 1], [], []>} : vector<17x64xbf16>, vector<64x32xbf16>, vector<17x32xf32> -> vector<17x32xf32>
    %c0_62 = arith.constant 0 : index
    %c0_63 = arith.constant 0 : index
    %176 = vector.load %arg12[%c0_62, %c0_63] : memref<1x32xf32, #tpu.memory_space<vmem>>, vector<1x32xf32>
    %177 = vector.broadcast %176 : vector<1x32xf32> to vector<17x32xf32>
    %178 = arith.addf %175, %177 : vector<17x32xf32>
    %179 = arith.addf %178, %134 : vector<17x32xf32>
    %c0_64 = arith.constant 0 : index
    %c0_65 = arith.constant 0 : index
    %c0_66 = arith.constant 0 : index
    %180 = vector.load %arg13[%c0_64, %c0_65, %c0_66] : memref<1x17x32xf32, #tpu.memory_space<vmem>>, vector<1x17x32xf32>
    %181 = vector.shape_cast %180 : vector<1x17x32xf32> to vector<17x32xf32>
    %182 = vector.shape_cast %179 : vector<17x32xf32> to vector<1x17x32xf32>
    tpu.vector_store %arg13[%c0_64, %c0_65, %c0_66], %182 {strides = array<i32>} : memref<1x17x32xf32, #tpu.memory_space<vmem>>, vector<1x17x32xf32>,
    return
  }
  func.func @transform_0(%arg0: i32) -> (i32, i32, i32) {
    %c0_i32 = arith.constant 0 : i32
    %c0_i32_0 = arith.constant 0 : i32
    %c0_i32_1 = arith.constant 0 : i32
    return %arg0, %c0_i32, %c0_i32_0 : i32, i32, i32
  }
  func.func @transform_1(%arg0: i32) -> (i32, i32) {
    %c0_i32 = arith.constant 0 : i32
    %c0_i32_0 = arith.constant 0 : i32
    %c0_i32_1 = arith.constant 0 : i32
    return %c0_i32, %c0_i32_0 : i32, i32
  }
  func.func @transform_2(%arg0: i32) -> (i32, i32) {
    %c0_i32 = arith.constant 0 : i32
    %c0_i32_0 = arith.constant 0 : i32
    %c0_i32_1 = arith.constant 0 : i32
    return %c0_i32, %c0_i32_0 : i32, i32
  }
  func.func @transform_3(%arg0: i32) -> (i32, i32) {
    %c0_i32 = arith.constant 0 : i32
    %c0_i32_0 = arith.constant 0 : i32
    %c0_i32_1 = arith.constant 0 : i32
    return %c0_i32, %c0_i32_0 : i32, i32
  }
  func.func @transform_4(%arg0: i32) -> (i32, i32) {
    %c0_i32 = arith.constant 0 : i32
    %c0_i32_0 = arith.constant 0 : i32
    %c0_i32_1 = arith.constant 0 : i32
    return %c0_i32, %c0_i32_0 : i32, i32
  }
  func.func @transform_5(%arg0: i32) -> (i32, i32) {
    %c0_i32 = arith.constant 0 : i32
    %c0_i32_0 = arith.constant 0 : i32
    %c0_i32_1 = arith.constant 0 : i32
    return %c0_i32, %c0_i32_0 : i32, i32
  }
  func.func @transform_6(%arg0: i32) -> (i32, i32) {
    %c0_i32 = arith.constant 0 : i32
    %c0_i32_0 = arith.constant 0 : i32
    %c0_i32_1 = arith.constant 0 : i32
    return %c0_i32, %c0_i32_0 : i32, i32
  }
  func.func @transform_7(%arg0: i32) -> (i32, i32) {
    %c0_i32 = arith.constant 0 : i32
    %c0_i32_0 = arith.constant 0 : i32
    %c0_i32_1 = arith.constant 0 : i32
    return %c0_i32, %c0_i32_0 : i32, i32
  }
  func.func @transform_8(%arg0: i32) -> (i32, i32) {
    %c0_i32 = arith.constant 0 : i32
    %c0_i32_0 = arith.constant 0 : i32
    %c0_i32_1 = arith.constant 0 : i32
    return %c0_i32, %c0_i32_0 : i32, i32
  }
  func.func @transform_9(%arg0: i32) -> (i32, i32) {
    %c0_i32 = arith.constant 0 : i32
    %c0_i32_0 = arith.constant 0 : i32
    %c0_i32_1 = arith.constant 0 : i32
    return %c0_i32, %c0_i32_0 : i32, i32
  }
  func.func @transform_10(%arg0: i32) -> (i32, i32) {
    %c0_i32 = arith.constant 0 : i32
    %c0_i32_0 = arith.constant 0 : i32
    %c0_i32_1 = arith.constant 0 : i32
    return %c0_i32, %c0_i32_0 : i32, i32
  }
  func.func @transform_11(%arg0: i32) -> (i32, i32) {
    %c0_i32 = arith.constant 0 : i32
    %c0_i32_0 = arith.constant 0 : i32
    %c0_i32_1 = arith.constant 0 : i32
    return %c0_i32, %c0_i32_0 : i32, i32
  }
  func.func @transform_12(%arg0: i32) -> (i32, i32, i32) {
    %c0_i32 = arith.constant 0 : i32
    %c0_i32_0 = arith.constant 0 : i32
    %c0_i32_1 = arith.constant 0 : i32
    return %arg0, %c0_i32, %c0_i32_0 : i32, i32, i32
  }
}

</mosaic_0001>

<llo_original>
// kernel: vision_transformer_forward.7
$region0: #{vision_transformer_forward.7}
  #allocation0 [shape = 'u32[]', space=smem, size = 0x4, offset = 0x4, fixed_abs, tag = 'smem constant byte address 0x4 - core index']
  #allocation1 [shape = 'u32[144,128]{1,0:T(1,128)}', space=vmem, size = 0x12000, scoped, tag = 'internal scratch']
  %s0 = inlined_call_operand.vmem [shape: f32[2,32], index: 0, kind: input, shape index: {}]
  %s1 = inlined_call_operand.vmem [shape: f32[1,32], index: 1, kind: input, shape index: {}]
  %s2 = inlined_call_operand.vmem [shape: f32[1,32], index: 2, kind: input, shape index: {}]
  %s3 = inlined_call_operand.vmem [shape: bf16[32,10], index: 3, kind: input, shape index: {}]
  %s4 = inlined_call_operand.vmem [shape: f32[1,10], index: 4, kind: input, shape index: {}]
  %s5 = inlined_call_operand.hbm [shape: f32[2,10], index: 5, kind: output, shape index: {}]
  %s6 = sld [smem:[#allocation0]]
  $region30: #{vision_transformer_forward.7} parent=0
    _
  %s8 = ssub.s32 1, %s6
  %s9 = scalar_select 0, %s8, %s6
  $region1: #{vision_transformer_forward.7} parent=0
    #allocation2 [shape = 'u8[1024]{0}', space=vmem, size = 0x400, scoped, tag = 'output window, operand 0, single buffered']
    #allocation3 [shape = 's32[1]{0}', space=sflag, size = 0x4, scoped, tag = 'scoped memory for vision_transformer_forward.7']
    %10 = vsyncpa [#allocation3], 0
    // Predicated region
    $region2: #{vision_transformer_forward.7} parent=1 // pred_check
      _
    $region3: #{vision_transformer_forward.7} parent=1 // pred_check_branch
      %12 = sbr.rel (0) target = $region5
    $region4: #{vision_transformer_forward.7} parent=1 // pred_region
      _
    $region5: #{vision_transformer_forward.7} parent=1 // pred_fallthru
      _
    // Predicated region
    $region6: #{vision_transformer_forward.7} parent=1 // pred_check
      _
    $region7: #{vision_transformer_forward.7} parent=1 // pred_check_branch
      %14 = sbr.rel (0) target = $region9
    $region8: #{vision_transformer_forward.7} parent=1 // pred_region
      _
    $region9: #{vision_transformer_forward.7} parent=1 // pred_fallthru
      _
    // Predicated region
    $region10: #{vision_transformer_forward.7} parent=1 // pred_check
      _
    $region11: #{vision_transformer_forward.7} parent=1 // pred_check_branch
      %16 = sbr.rel (0) target = $region13
    $region12: #{vision_transformer_forward.7} parent=1 // pred_region
      _
    $region13: #{vision_transformer_forward.7} parent=1 // pred_fallthru
      _
    // Predicated region
    $region14: #{vision_transformer_forward.7} parent=1 // pred_check
      _
    $region15: #{vision_transformer_forward.7} parent=1 // pred_check_branch
      %18 = sbr.rel (0) target = $region17
    $region16: #{vision_transformer_forward.7} parent=1 // pred_region
      _
    $region17: #{vision_transformer_forward.7} parent=1 // pred_fallthru
      _
    // Predicated region
    $region18: #{vision_transformer_forward.7} parent=1 // pred_check
      _
    $region19: #{vision_transformer_forward.7} parent=1 // pred_check_branch
      %20 = sbr.rel (0) target = $region21
    $region20: #{vision_transformer_forward.7} parent=1 // pred_region
      _
    $region21: #{vision_transformer_forward.7} parent=1 // pred_fallthru
      _
    %v22 = vld [vmem:[%s0] sm:$0x3]
    %v23 = vld [vmem:[%s1] sm:$0x1]
    %v24 = vld [vmem:[%s2] sm:$0x1]
    %vm25 = vcmask 254976
    %v26 = vsel %vm25, %v22, 0.0
    %27 = vadd.xlane.f32.xlu0 %v26
    %v28 = vpop.xlane.xlu0 %27
    %v29 = vrcp.pop 32.0
    %v30 = vmul.f32 %v28, %v29
    %v31 = vsub.f32 %v22, %v30
    %v32 = vmul.f32 %v31, %v31
    %v33 = vsel %vm25, %v32, 0.0
    %34 = vadd.xlane.f32.xlu0 %v33
    %v35 = vpop.xlane.xlu0 %34
    %v36 = vmul.f32 %v35, %v29
    %v37 = vadd.f32 %v36, 1e-05
    %v38 = vrsqrt.pop %v37
    %v39 = vmul.f32 %v31, %v38
    %v41 = vlaneseq
    %v42 = vshrl.u32 %v41, 7
    %v43 = vsub.s32 0, %v42
    %v44 = vrot.slane %v23, %v43
    %v46 = vmul.f32 %v39, %v44
    %v48 = vlaneseq
    %v49 = vshrl.u32 %v48, 7
    %v50 = vsub.s32 0, %v49
    %v51 = vrot.slane %v24, %v50
    %v53 = vadd.f32 %v46, %v51
    %v54 = vpack.c.bf16 %v53, %v53
    %v55 = vld [vmem:[%s3] sm:$0xf]
    %v56 = vld [vmem:[%s3 + $0x4] sm:$0xf]
    %v57 = vld [vmem:[%s3 + $0x8] sm:$0xf]
    %v58 = vld [vmem:[%s3 + $0xc] sm:$0xf]
    %v59 = vld [vmem:[%s4] sm:$0x1]
    %v61 = vlaneseq
    %v62 = vshrl.u32 %v61, 7
    %v63 = vsub.s32 0, %v62
    %v64 = vrot.slane %v59, %v63
    %v70 = vunpack.c.l.b16 %v55
    %v71 = vunpack.c.l.b16 %v56
    %v72 = vunpack.c.l.b16 %v57
    %v73 = vunpack.c.l.b16 %v58
    %v74 = vpack.c.b16 %v71, %v70
    %v75 = vpack.c.b16 %v73, %v72
    %vm78 = vcmask 261120
    %v80 = vsel %vm78, %v54, 0
    %82 = vmatprep.subr.bf16.mxu0 0
    %83 = vmatpush1.bf16.msra.mxu0 %v74
    %84 = vmatprep.subr.bf16.mxu0 0
    %85 = vmatpush1.bf16.msra.mxu0 %v75
    %86 = vmatprep.subr.bf16.mxu0 0
    %87 = vmatpush1.bf16.msra.mxu0 0
    %88 = vmatprep.subr.bf16.mxu0 0
    %89 = vmatpush1.bf16.msra.mxu0 0
    %90 = vmatprep.subr.bf16.mxu0 0
    %91 = vmatpush1.bf16.msra.mxu0 0
    %92 = vmatprep.subr.bf16.mxu0 0
    %93 = vmatpush1.bf16.msra.mxu0 0
    %94 = vmatprep.subr.bf16.mxu0 0
    %95 = vmatpush1.bf16.msra.mxu0 0
    %96 = vmatprep.subr.bf16.mxu0 0
    %97 = vmatpush1.bf16.msra.mxu0 0
    %98 = vmatprep.subr.bf16.mxu0 0
    %99 = vmatpush1.bf16.msra.mxu0 0
    %100 = vmatprep.subr.bf16.mxu0 0
    %101 = vmatpush1.bf16.msra.mxu0 0
    %102 = vmatprep.subr.bf16.mxu0 0
    %103 = vmatpush1.bf16.msra.mxu0 0
    %104 = vmatprep.subr.bf16.mxu0 0
    %105 = vmatpush1.bf16.msra.mxu0 0
    %106 = vmatprep.subr.bf16.mxu0 0
    %107 = vmatpush1.bf16.msra.mxu0 0
    %108 = vmatprep.subr.bf16.mxu0 0
    %109 = vmatpush1.bf16.msra.mxu0 0
    %110 = vmatprep.subr.bf16.mxu0 0
    %111 = vmatpush1.bf16.msra.mxu0 0
    %112 = vmatprep.subr.bf16.mxu0 0
    %113 = vmatpush1.bf16.msra.mxu0 0
    %114 = vmatprep.mubr.bf16.mxu0 0
    %115 = vmatmul.mubr.bf16.gmra.mrb[0].mxu0 %v80
    %v116 = vpop.f32.mrb[0].mxu0
    %v117 = vadd.f32 %v64, %v116
    %v118 = vpop.f32.mrb[0].mxu0
    %v119 = vpop.f32.mrb[0].mxu0
    %v120 = vpop.f32.mrb[0].mxu0
    %121 = vdwg.mxu0
    %vm122 = vcmask 74752
    %123 = vst.msk [vmem:[#allocation2] sm:$0x3] %vm122, %v117
    // Predicated region
    $region22: #{vision_transformer_forward.7} parent=1 // pred_check
      _
    $region23: #{vision_transformer_forward.7} parent=1 // pred_check_branch
      %125 = sbr.rel (0) target = $region25
    $region24: #{vision_transformer_forward.7} parent=1 // pred_region
      %s127 = ssub.s32 32, 32
      %128 = vsyncadd [#allocation3], %s127
      %s130 = sshll.u32 [#allocation2], 4
      %s131 = int_to_ptr.vmem [resolvable:$true] %s130
      %133 = dma.vmem_to_hbm [thread:$0]  %s131, 32, %s5, [#allocation3]
    $region25: #{vision_transformer_forward.7} parent=1 // pred_fallthru
      _
    // Predicated region
    $region26: #{vision_transformer_forward.7} parent=1 // pred_check
      _
    $region27: #{vision_transformer_forward.7} parent=1 // pred_check_branch
      %135 = sbr.rel (0) target = $region29
    $region28: #{vision_transformer_forward.7} parent=1 // pred_region
      %136 = dma.done [#allocation3], 32
    $region29: #{vision_transformer_forward.7} parent=1 // pred_fallthru
      _
    %137 = vsyncpa [#allocation3], 1

// kernel: vision_transformer_forward.4
$region0: #{vision_transformer_forward.4}
  #allocation0 [shape = 'u32[]', space=smem, size = 0x4, offset = 0x4, fixed_abs, tag = 'smem constant byte address 0x4 - core index']
  #allocation1 [shape = 'u32[144,128]{1,0:T(1,128)}', space=vmem, size = 0x12000, scoped, tag = 'internal scratch']
  %s0 = inlined_call_operand.vmem [shape: f32[32,32], index: 0, kind: input, shape index: {}]
  %s1 = inlined_call_operand.vmem [shape: bf16[32,32], index: 1, kind: input, shape index: {}]
  %s2 = inlined_call_operand.vmem [shape: f32[1,32], index: 2, kind: input, shape index: {}]
  %s3 = inlined_call_operand.vmem [shape: f32[32,32], index: 3, kind: output, shape index: {}]
  %s4 = sld [smem:[#allocation0]]
  $region22: #{vision_transformer_forward.4} parent=0
    _
  %s6 = ssub.s32 1, %s4
  %s7 = scalar_select 0, %s6, %s4
  // Predicated region
  $region2: #{vision_transformer_forward.4} parent=0 // pred_check
    _
  $region3: #{vision_transformer_forward.4} parent=0 // pred_check_branch
    %9 = sbr.rel (0) target = $region5
  $region4: #{vision_transformer_forward.4} parent=0 // pred_region
    _
  $region5: #{vision_transformer_forward.4} parent=0 // pred_fallthru
    _
  // Predicated region
  $region6: #{vision_transformer_forward.4} parent=0 // pred_check
    _
  $region7: #{vision_transformer_forward.4} parent=0 // pred_check_branch
    %11 = sbr.rel (0) target = $region9
  $region8: #{vision_transformer_forward.4} parent=0 // pred_region
    _
  $region9: #{vision_transformer_forward.4} parent=0 // pred_fallthru
    _
  // Predicated region
  $region10: #{vision_transformer_forward.4} parent=0 // pred_check
    _
  $region11: #{vision_transformer_forward.4} parent=0 // pred_check_branch
    %13 = sbr.rel (0) target = $region13
  $region12: #{vision_transformer_forward.4} parent=0 // pred_region
    _
  $region13: #{vision_transformer_forward.4} parent=0 // pred_fallthru
    _
  %v15 = vld [vmem:[%s0] sm:$0xff]
  %v16 = vld [vmem:[%s0 + $0x8] sm:$0xff]
  %v17 = vld [vmem:[%s0 + $0x10] sm:$0xff]
  %v18 = vld [vmem:[%s0 + $0x18] sm:$0xff]
  %v19 = vpack.c.bf16 %v16, %v15
  %v20 = vpack.c.bf16 %v18, %v17
  %v21 = vld [vmem:[%s1] sm:$0xf]
  %v22 = vld [vmem:[%s1 + $0x4] sm:$0xf]
  %v23 = vld [vmem:[%s1 + $0x8] sm:$0xf]
  %v24 = vld [vmem:[%s1 + $0xc] sm:$0xf]
  %v25 = vld [vmem:[%s2] sm:$0x1]
  %v27 = vlaneseq
  %v28 = vshrl.u32 %v27, 7
  %v29 = vsub.s32 0, %v28
  %v30 = vrot.slane %v25, %v29
  %v36 = vunpack.c.l.b16 %v21
  %v37 = vunpack.c.l.b16 %v22
  %v38 = vunpack.c.l.b16 %v23
  %v39 = vunpack.c.l.b16 %v24
  %v40 = vpack.c.b16 %v37, %v36
  %v41 = vpack.c.b16 %v39, %v38
  %vm44 = vcmask 261120
  %v46 = vsel %vm44, %v19, 0
  %v49 = vsel %vm44, %v20, 0
  %51 = vmatprep.subr.bf16.mxu0 0
  %52 = vmatpush1.bf16.msra.mxu0 %v40
  %53 = vmatprep.subr.bf16.mxu0 0
  %54 = vmatpush1.bf16.msra.mxu0 %v41
  %55 = vmatprep.subr.bf16.mxu0 0
  %56 = vmatpush1.bf16.msra.mxu0 0
  %57 = vmatprep.subr.bf16.mxu0 0
  %58 = vmatpush1.bf16.msra.mxu0 0
  %59 = vmatprep.subr.bf16.mxu0 0
  %60 = vmatpush1.bf16.msra.mxu0 0
  %61 = vmatprep.subr.bf16.mxu0 0
  %62 = vmatpush1.bf16.msra.mxu0 0
  %63 = vmatprep.subr.bf16.mxu0 0
  %64 = vmatpush1.bf16.msra.mxu0 0
  %65 = vmatprep.subr.bf16.mxu0 0
  %66 = vmatpush1.bf16.msra.mxu0 0
  %67 = vmatprep.subr.bf16.mxu0 0
  %68 = vmatpush1.bf16.msra.mxu0 0
  %69 = vmatprep.subr.bf16.mxu0 0
  %70 = vmatpush1.bf16.msra.mxu0 0
  %71 = vmatprep.subr.bf16.mxu0 0
  %72 = vmatpush1.bf16.msra.mxu0 0
  %73 = vmatprep.subr.bf16.mxu0 0
  %74 = vmatpush1.bf16.msra.mxu0 0
  %75 = vmatprep.subr.bf16.mxu0 0
  %76 = vmatpush1.bf16.msra.mxu0 0
  %77 = vmatprep.subr.bf16.mxu0 0
  %78 = vmatpush1.bf16.msra.mxu0 0
  %79 = vmatprep.subr.bf16.mxu0 0
  %80 = vmatpush1.bf16.msra.mxu0 0
  %81 = vmatprep.subr.bf16.mxu0 0
  %82 = vmatpush1.bf16.msra.mxu0 0
  %83 = vmatprep.mubr.bf16.mxu0 0
  %84 = vmatmul.mubr.bf16.gmra.mrb[0].mxu0 %v46
  %v85 = vpop.f32.mrb[0].mxu0
  %v86 = vadd.f32 %v30, %v85
  %v87 = vpop.f32.mrb[0].mxu0
  %v88 = vpop.f32.mrb[0].mxu0
  %v89 = vadd.f32 %v30, %v88
  %v90 = vpop.f32.mrb[0].mxu0
  %91 = vmatprep.mubr.bf16.mxu0 0
  %92 = vmatmul.mubr.bf16.gmra.mrb[0].mxu0 %v49
  %v93 = vpop.f32.mrb[0].mxu0
  %v94 = vadd.f32 %v30, %v93
  %v95 = vpop.f32.mrb[0].mxu0
  %v96 = vpop.f32.mrb[0].mxu0
  %v97 = vadd.f32 %v30, %v96
  %v98 = vpop.f32.mrb[0].mxu0
  %99 = vdwg.mxu0
  %100 = vst.msk [vmem:[%s3] sm:$0xff] %vm44, %v86
  %101 = vst.msk [vmem:[%s3 + $0x8] sm:$0xff] %vm44, %v89
  %102 = vst.msk [vmem:[%s3 + $0x10] sm:$0xff] %vm44, %v94
  %103 = vst.msk [vmem:[%s3 + $0x18] sm:$0xff] %vm44, %v97
  // Predicated region
  $region14: #{vision_transformer_forward.4} parent=0 // pred_check
    _
  $region15: #{vision_transformer_forward.4} parent=0 // pred_check_branch
    %105 = sbr.rel (0) target = $region17
  $region16: #{vision_transformer_forward.4} parent=0 // pred_region
    _
  $region17: #{vision_transformer_forward.4} parent=0 // pred_fallthru
    _
  // Predicated region
  $region18: #{vision_transformer_forward.4} parent=0 // pred_check
    _
  $region19: #{vision_transformer_forward.4} parent=0 // pred_check_branch
    %107 = sbr.rel (0) target = $region21
  $region20: #{vision_transformer_forward.4} parent=0 // pred_region
    _
  $region21: #{vision_transformer_forward.4} parent=0 // pred_fallthru
    _

// kernel: vision_transformer_forward.5
$region0: #{vision_transformer_forward.5}
  #allocation0 [shape = 'u32[]', space=smem, size = 0x4, offset = 0x4, fixed_abs, tag = 'smem constant byte address 0x4 - core index']
  #allocation1 [shape = 'u32[144,128]{1,0:T(1,128)}', space=vmem, size = 0x12000, scoped, tag = 'internal scratch']
  %s0 = inlined_call_operand.vmem [shape: f32[2,17,32], index: 0, kind: input, shape index: {}]
  %s1 = inlined_call_operand.vmem [shape: f32[1,32], index: 1, kind: input, shape index: {}]
  %s2 = inlined_call_operand.vmem [shape: f32[1,32], index: 2, kind: input, shape index: {}]
  %s3 = inlined_call_operand.vmem [shape: bf16[32,96], index: 3, kind: input, shape index: {}]
  %s4 = inlined_call_operand.vmem [shape: bf16[32,32], index: 4, kind: input, shape index: {}]
  %s5 = inlined_call_operand.vmem [shape: f32[1,32], index: 5, kind: input, shape index: {}]
  %s6 = inlined_call_operand.vmem [shape: f32[1,32], index: 6, kind: input, shape index: {}]
  %s7 = inlined_call_operand.vmem [shape: f32[1,32], index: 7, kind: input, shape index: {}]
  %s8 = inlined_call_operand.vmem [shape: bf16[32,64], index: 8, kind: input, shape index: {}]
  %s9 = inlined_call_operand.vmem [shape: f32[1,64], index: 9, kind: input, shape index: {}]
  %s10 = inlined_call_operand.vmem [shape: bf16[64,32], index: 10, kind: input, shape index: {}]
  %s11 = inlined_call_operand.vmem [shape: f32[1,32], index: 11, kind: input, shape index: {}]
  %s12 = inlined_call_operand.vmem [shape: f32[2,17,32], index: 12, kind: output, shape index: {}]
  %s13 = sld [smem:[#allocation0]]
  $region81: #{vision_transformer_forward.5} parent=0
    _
  %s15 = ssub.s32 1, %s13
  %s16 = scalar_select 0, %s15, %s13
  loop: start=0, step=1, limit=4
  $region2: #{vision_transformer_forward.5} parent=0 // loop_pre_header
    _
  $region3: #{vision_transformer_forward.5} parent=0 // loop_header
    %s18 = sphi 0, %s22
    %p19 = scmp.ge.s32.totalorder %s18, 4
    %s28 = sphi 0, %s30
    %s31 = sphi 0, %s28
    %s32 = sphi 0, %s31
    %s48 = sphi 0, %s32
    %s52 = sphi 0, %s52
    %s54 = sphi 0, %s52
    %s55 = sphi 0, %s54
    %s69 = sphi 0, %s55
    %s73 = sphi 0, %s73
    %s75 = sphi 0, %s73
    %s76 = sphi 0, %s75
    %s90 = sphi 0, %s76
    %s94 = sphi 0, %s94
    %s96 = sphi 0, %s94
    %s97 = sphi 0, %s96
    %s111 = sphi 0, %s97
    %s115 = sphi 0, %s115
    %s117 = sphi 0, %s115
    %s118 = sphi 0, %s117
    %s132 = sphi 0, %s118
    %s136 = sphi 0, %s136
    %s138 = sphi 0, %s136
    %s139 = sphi 0, %s138
    %s153 = sphi 0, %s139
    %s157 = sphi 0, %s157
    %s159 = sphi 0, %s157
    %s160 = sphi 0, %s159
    %s174 = sphi 0, %s160
    %s178 = sphi 0, %s178
    %s180 = sphi 0, %s178
    %s181 = sphi 0, %s180
    %s195 = sphi 0, %s181
    %s199 = sphi 0, %s199
    %s201 = sphi 0, %s199
    %s202 = sphi 0, %s201
    %s216 = sphi 0, %s202
    %s220 = sphi 0, %s220
    %s222 = sphi 0, %s220
    %s223 = sphi 0, %s222
    %s237 = sphi 0, %s223
    %s241 = sphi 0, %s241
    %s243 = sphi 0, %s241
    %s244 = sphi 0, %s243
    %s258 = sphi 0, %s244
    %s262 = sphi 0, %s262
    %s264 = sphi 0, %s262
    %s265 = sphi 0, %s264
    %s279 = sphi 0, %s265
    %s285 = sphi 0, %s287
    %s288 = sphi 0, %s285
    %s289 = sphi 0, %s288
    %s305 = sphi 0, %s289
  $region4: #{vision_transformer_forward.5} parent=0 // loop_header_branch
    %21 = sbr.rel (%p19) target = $region8
  $region5: #{vision_transformer_forward.5} parent=0 // loop_body
    %s23 = ssub.s32 %s18, 1
    %s24 = ssub.s32 %s18, 2
    %s25 = sadd.s32 %s18, 1
    %s26 = ssub.s32 %s18, %s25
    %p27 = scmp.eq.s32.totalorder %s26, 0
    %s29 = sadd.s32 %s28, 1
    %s30 = scalar_select %p27, %s28, %s29
    %p33 = pneg %p27
    %p34 = scmp.eq.s32.totalorder %s18, 1
    %p35 = por %p33, %p34
    %p36 = scmp.ne.s32.totalorder %s28, %s31
    %p37 = scmp.eq.s32.totalorder %s18, 0
    %p38 = por %p36, %p37
    %p39 = scmp.ne.s32.totalorder %s28, %s31
    %p40 = scmp.eq.s32.totalorder %s23, 1
    %p41 = por %p39, %p40
    %p42 = scmp.ne.s32.totalorder %s31, %s32
    %p43 = scmp.eq.s32.totalorder %s23, 0
    %p44 = por %p42, %p43
    %p45 = scmp.ne.s32.totalorder %s31, %s32
    %p46 = scmp.eq.s32.totalorder %s24, 1
    %p47 = por %p45, %p46
    %p49 = scmp.ne.s32.totalorder %s32, %s48
    %p50 = scmp.eq.s32.totalorder %s24, 0
    %p51 = por %p49, %p50
    %s53 = sadd.s32 %s52, 1
    %p56 = scmp.eq.s32.totalorder %s18, 1
    %p57 = scmp.ne.s32.totalorder %s52, %s54
    %p58 = scmp.eq.s32.totalorder %s18, 0
    %p59 = por %p57, %p58
    %p60 = scmp.ne.s32.totalorder %s52, %s54
    %p61 = scmp.eq.s32.totalorder %s23, 1
    %p62 = por %p60, %p61
    %p63 = scmp.ne.s32.totalorder %s54, %s55
    %p64 = scmp.eq.s32.totalorder %s23, 0
    %p65 = por %p63, %p64
    %p66 = scmp.ne.s32.totalorder %s54, %s55
    %p67 = scmp.eq.s32.totalorder %s24, 1
    %p68 = por %p66, %p67
    %p70 = scmp.ne.s32.totalorder %s55, %s69
    %p71 = scmp.eq.s32.totalorder %s24, 0
    %p72 = por %p70, %p71
    %s74 = sadd.s32 %s73, 1
    %p77 = scmp.eq.s32.totalorder %s18, 1
    %p78 = scmp.ne.s32.totalorder %s73, %s75
    %p79 = scmp.eq.s32.totalorder %s18, 0
    %p80 = por %p78, %p79
    %p81 = scmp.ne.s32.totalorder %s73, %s75
    %p82 = scmp.eq.s32.totalorder %s23, 1
    %p83 = por %p81, %p82
    %p84 = scmp.ne.s32.totalorder %s75, %s76
    %p85 = scmp.eq.s32.totalorder %s23, 0
    %p86 = por %p84, %p85
    %p87 = scmp.ne.s32.totalorder %s75, %s76
    %p88 = scmp.eq.s32.totalorder %s24, 1
    %p89 = por %p87, %p88
    %p91 = scmp.ne.s32.totalorder %s76, %s90
    %p92 = scmp.eq.s32.totalorder %s24, 0
    %p93 = por %p91, %p92
    %s95 = sadd.s32 %s94, 1
    %p98 = scmp.eq.s32.totalorder %s18, 1
    %p99 = scmp.ne.s32.totalorder %s94, %s96
    %p100 = scmp.eq.s32.totalorder %s18, 0
    %p101 = por %p99, %p100
    %p102 = scmp.ne.s32.totalorder %s94, %s96
    %p103 = scmp.eq.s32.totalorder %s23, 1
    %p104 = por %p102, %p103
    %p105 = scmp.ne.s32.totalorder %s96, %s97
    %p106 = scmp.eq.s32.totalorder %s23, 0
    %p107 = por %p105, %p106
    %p108 = scmp.ne.s32.totalorder %s96, %s97
    %p109 = scmp.eq.s32.totalorder %s24, 1
    %p110 = por %p108, %p109
    %p112 = scmp.ne.s32.totalorder %s97, %s111
    %p113 = scmp.eq.s32.totalorder %s24, 0
    %p114 = por %p112, %p113
    %s116 = sadd.s32 %s115, 1
    %p119 = scmp.eq.s32.totalorder %s18, 1
    %p120 = scmp.ne.s32.totalorder %s115, %s117
    %p121 = scmp.eq.s32.totalorder %s18, 0
    %p122 = por %p120, %p121
    %p123 = scmp.ne.s32.totalorder %s115, %s117
    %p124 = scmp.eq.s32.totalorder %s23, 1
    %p125 = por %p123, %p124
    %p126 = scmp.ne.s32.totalorder %s117, %s118
    %p127 = scmp.eq.s32.totalorder %s23, 0
    %p128 = por %p126, %p127
    %p129 = scmp.ne.s32.totalorder %s117, %s118
    %p130 = scmp.eq.s32.totalorder %s24, 1
    %p131 = por %p129, %p130
    %p133 = scmp.ne.s32.totalorder %s118, %s132
    %p134 = scmp.eq.s32.totalorder %s24, 0
    %p135 = por %p133, %p134
    %s137 = sadd.s32 %s136, 1
    %p140 = scmp.eq.s32.totalorder %s18, 1
    %p141 = scmp.ne.s32.totalorder %s136, %s138
    %p142 = scmp.eq.s32.totalorder %s18, 0
    %p143 = por %p141, %p142
    %p144 = scmp.ne.s32.totalorder %s136, %s138
    %p145 = scmp.eq.s32.totalorder %s23, 1
    %p146 = por %p144, %p145
    %p147 = scmp.ne.s32.totalorder %s138, %s139
    %p148 = scmp.eq.s32.totalorder %s23, 0
    %p149 = por %p147, %p148
    %p150 = scmp.ne.s32.totalorder %s138, %s139
    %p151 = scmp.eq.s32.totalorder %s24, 1
    %p152 = por %p150, %p151
    %p154 = scmp.ne.s32.totalorder %s139, %s153
    %p155 = scmp.eq.s32.totalorder %s24, 0
    %p156 = por %p154, %p155
    %s158 = sadd.s32 %s157, 1
    %p161 = scmp.eq.s32.totalorder %s18, 1
    %p162 = scmp.ne.s32.totalorder %s157, %s159
    %p163 = scmp.eq.s32.totalorder %s18, 0
    %p164 = por %p162, %p163
    %p165 = scmp.ne.s32.totalorder %s157, %s159
    %p166 = scmp.eq.s32.totalorder %s23, 1
    %p167 = por %p165, %p166
    %p168 = scmp.ne.s32.totalorder %s159, %s160
    %p169 = scmp.eq.s32.totalorder %s23, 0
    %p170 = por %p168, %p169
    %p171 = scmp.ne.s32.totalorder %s159, %s160
    %p172 = scmp.eq.s32.totalorder %s24, 1
    %p173 = por %p171, %p172
    %p175 = scmp.ne.s32.totalorder %s160, %s174
    %p176 = scmp.eq.s32.totalorder %s24, 0
    %p177 = por %p175, %p176
    %s179 = sadd.s32 %s178, 1
    %p182 = scmp.eq.s32.totalorder %s18, 1
    %p183 = scmp.ne.s32.totalorder %s178, %s180
    %p184 = scmp.eq.s32.totalorder %s18, 0
    %p185 = por %p183, %p184
    %p186 = scmp.ne.s32.totalorder %s178, %s180
    %p187 = scmp.eq.s32.totalorder %s23, 1
    %p188 = por %p186, %p187
    %p189 = scmp.ne.s32.totalorder %s180, %s181
    %p190 = scmp.eq.s32.totalorder %s23, 0
    %p191 = por %p189, %p190
    %p192 = scmp.ne.s32.totalorder %s180, %s181
    %p193 = scmp.eq.s32.totalorder %s24, 1
    %p194 = por %p192, %p193
    %p196 = scmp.ne.s32.totalorder %s181, %s195
    %p197 = scmp.eq.s32.totalorder %s24, 0
    %p198 = por %p196, %p197
    %s200 = sadd.s32 %s199, 1
    %p203 = scmp.eq.s32.totalorder %s18, 1
    %p204 = scmp.ne.s32.totalorder %s199, %s201
    %p205 = scmp.eq.s32.totalorder %s18, 0
    %p206 = por %p204, %p205
    %p207 = scmp.ne.s32.totalorder %s199, %s201
    %p208 = scmp.eq.s32.totalorder %s23, 1
    %p209 = por %p207, %p208
    %p210 = scmp.ne.s32.totalorder %s201, %s202
    %p211 = scmp.eq.s32.totalorder %s23, 0
    %p212 = por %p210, %p211
    %p213 = scmp.ne.s32.totalorder %s201, %s202
    %p214 = scmp.eq.s32.totalorder %s24, 1
    %p215 = por %p213, %p214
    %p217 = scmp.ne.s32.totalorder %s202, %s216
    %p218 = scmp.eq.s32.totalorder %s24, 0
    %p219 = por %p217, %p218
    %s221 = sadd.s32 %s220, 1
    %p224 = scmp.eq.s32.totalorder %s18, 1
    %p225 = scmp.ne.s32.totalorder %s220, %s222
    %p226 = scmp.eq.s32.totalorder %s18, 0
    %p227 = por %p225, %p226
    %p228 = scmp.ne.s32.totalorder %s220, %s222
    %p229 = scmp.eq.s32.totalorder %s23, 1
    %p230 = por %p228, %p229
    %p231 = scmp.ne.s32.totalorder %s222, %s223
    %p232 = scmp.eq.s32.totalorder %s23, 0
    %p233 = por %p231, %p232
    %p234 = scmp.ne.s32.totalorder %s222, %s223
    %p235 = scmp.eq.s32.totalorder %s24, 1
    %p236 = por %p234, %p235
    %p238 = scmp.ne.s32.totalorder %s223, %s237
    %p239 = scmp.eq.s32.totalorder %s24, 0
    %p240 = por %p238, %p239
    %s242 = sadd.s32 %s241, 1
    %p245 = scmp.eq.s32.totalorder %s18, 1
    %p246 = scmp.ne.s32.totalorder %s241, %s243
    %p247 = scmp.eq.s32.totalorder %s18, 0
    %p248 = por %p246, %p247
    %p249 = scmp.ne.s32.totalorder %s241, %s243
    %p250 = scmp.eq.s32.totalorder %s23, 1
    %p251 = por %p249, %p250
    %p252 = scmp.ne.s32.totalorder %s243, %s244
    %p253 = scmp.eq.s32.totalorder %s23, 0
    %p254 = por %p252, %p253
    %p255 = scmp.ne.s32.totalorder %s243, %s244
    %p256 = scmp.eq.s32.totalorder %s24, 1
    %p257 = por %p255, %p256
    %p259 = scmp.ne.s32.totalorder %s244, %s258
    %p260 = scmp.eq.s32.totalorder %s24, 0
    %p261 = por %p259, %p260
    %s263 = sadd.s32 %s262, 1
    %p266 = scmp.eq.s32.totalorder %s18, 1
    %p267 = scmp.ne.s32.totalorder %s262, %s264
    %p268 = scmp.eq.s32.totalorder %s18, 0
    %p269 = por %p267, %p268
    %p270 = scmp.ne.s32.totalorder %s262, %s264
    %p271 = scmp.eq.s32.totalorder %s23, 1
    %p272 = por %p270, %p271
    %p273 = scmp.ne.s32.totalorder %s264, %s265
    %p274 = scmp.eq.s32.totalorder %s23, 0
    %p275 = por %p273, %p274
    %p276 = scmp.ne.s32.totalorder %s264, %s265
    %p277 = scmp.eq.s32.totalorder %s24, 1
    %p278 = por %p276, %p277
    %p280 = scmp.ne.s32.totalorder %s265, %s279
    %p281 = scmp.eq.s32.totalorder %s24, 0
    %p282 = por %p280, %p281
    %s283 = ssub.s32 %s18, %s25
    %p284 = scmp.eq.s32.totalorder %s283, 0
    %s286 = sadd.s32 %s285, 1
    %s287 = scalar_select %p284, %s285, %s286
    %p290 = pneg %p284
    %p291 = scmp.eq.s32.totalorder %s18, 1
    %p292 = por %p290, %p291
    %p293 = scmp.ne.s32.totalorder %s285, %s288
    %p294 = scmp.eq.s32.totalorder %s18, 0
    %p295 = por %p293, %p294
    %p296 = scmp.ne.s32.totalorder %s285, %s288
    %p297 = scmp.eq.s32.totalorder %s23, 1
    %p298 = por %p296, %p297
    %p299 = scmp.ne.s32.totalorder %s288, %s289
    %p300 = scmp.eq.s32.totalorder %s23, 0
    %p301 = por %p299, %p300
    %p302 = scmp.ne.s32.totalorder %s288, %s289
    %p303 = scmp.eq.s32.totalorder %s24, 1
    %p304 = por %p302, %p303
    %p306 = scmp.ne.s32.totalorder %s289, %s305
    %p307 = scmp.eq.s32.totalorder %s24, 0
    %p308 = por %p306, %p307
    %p309 = scmp.le.s32.totalorder 1, %s18
    %p310 = scmp.lt.s32.totalorder %s18, 3
    %p311 = pnand %p309, %p310
    %p312 = pneg %p311
    // Predicated region
    $region9: #{vision_transformer_forward.5} parent=5 // pred_check
      _
    $region10: #{vision_transformer_forward.5} parent=5 // pred_check_branch
      %314 = sbr.rel (%p311) target = $region12
    $region11: #{vision_transformer_forward.5} parent=5 // pred_region
      %s315 = ssub.s32 %s18, 1
      // Predicated region
      $region13: #{vision_transformer_forward.5} parent=11 // pred_check
        %p316 = pneg %p65
      $region14: #{vision_transformer_forward.5} parent=11 // pred_check_branch
        %318 = sbr.rel (%p316) target = $region16
      $region15: #{vision_transformer_forward.5} parent=11 // pred_region
        _
      $region16: #{vision_transformer_forward.5} parent=11 // pred_fallthru
        _
      // Predicated region
      $region17: #{vision_transformer_forward.5} parent=11 // pred_check
        %p319 = pneg %p86
      $region18: #{vision_transformer_forward.5} parent=11 // pred_check_branch
        %321 = sbr.rel (%p319) target = $region20
      $region19: #{vision_transformer_forward.5} parent=11 // pred_region
        _
      $region20: #{vision_transformer_forward.5} parent=11 // pred_fallthru
        _
      // Predicated region
      $region21: #{vision_transformer_forward.5} parent=11 // pred_check
        %p322 = pneg %p107
      $region22: #{vision_transformer_forward.5} parent=11 // pred_check_branch
        %324 = sbr.rel (%p322) target = $region24
      $region23: #{vision_transformer_forward.5} parent=11 // pred_region
        _
      $region24: #{vision_transformer_forward.5} parent=11 // pred_fallthru
        _
      // Predicated region
      $region25: #{vision_transformer_forward.5} parent=11 // pred_check
        %p325 = pneg %p128
      $region26: #{vision_transformer_forward.5} parent=11 // pred_check_branch
        %327 = sbr.rel (%p325) target = $region28
      $region27: #{vision_transformer_forward.5} parent=11 // pred_region
        _
      $region28: #{vision_transformer_forward.5} parent=11 // pred_fallthru
        _
      // Predicated region
      $region29: #{vision_transformer_forward.5} parent=11 // pred_check
        %p328 = pneg %p149
      $region30: #{vision_transformer_forward.5} parent=11 // pred_check_branch
        %330 = sbr.rel (%p328) target = $region32
      $region31: #{vision_transformer_forward.5} parent=11 // pred_region
        _
      $region32: #{vision_transformer_forward.5} parent=11 // pred_fallthru
        _
      // Predicated region
      $region33: #{vision_transformer_forward.5} parent=11 // pred_check
        %p331 = pneg %p170
      $region34: #{vision_transformer_forward.5} parent=11 // pred_check_branch
        %333 = sbr.rel (%p331) target = $region36
      $region35: #{vision_transformer_forward.5} parent=11 // pred_region
        _
      $region36: #{vision_transformer_forward.5} parent=11 // pred_fallthru
        _
      // Predicated region
      $region37: #{vision_transformer_forward.5} parent=11 // pred_check
        %p334 = pneg %p191
      $region38: #{vision_transformer_forward.5} parent=11 // pred_check_branch
        %336 = sbr.rel (%p334) target = $region40
      $region39: #{vision_transformer_forward.5} parent=11 // pred_region
        _
      $region40: #{vision_transformer_forward.5} parent=11 // pred_fallthru
        _
      // Predicated region
      $region41: #{vision_transformer_forward.5} parent=11 // pred_check
        %p337 = pneg %p212
      $region42: #{vision_transformer_forward.5} parent=11 // pred_check_branch
        %339 = sbr.rel (%p337) target = $region44
      $region43: #{vision_transformer_forward.5} parent=11 // pred_region
        _
      $region44: #{vision_transformer_forward.5} parent=11 // pred_fallthru
        _
      // Predicated region
      $region45: #{vision_transformer_forward.5} parent=11 // pred_check
        %p340 = pneg %p233
      $region46: #{vision_transformer_forward.5} parent=11 // pred_check_branch
        %342 = sbr.rel (%p340) target = $region48
      $region47: #{vision_transformer_forward.5} parent=11 // pred_region
        _
      $region48: #{vision_transformer_forward.5} parent=11 // pred_fallthru
        _
      // Predicated region
      $region49: #{vision_transformer_forward.5} parent=11 // pred_check
        %p343 = pneg %p254
      $region50: #{vision_transformer_forward.5} parent=11 // pred_check_branch
        %345 = sbr.rel (%p343) target = $region52
      $region51: #{vision_transformer_forward.5} parent=11 // pred_region
        _
      $region52: #{vision_transformer_forward.5} parent=11 // pred_fallthru
        _
      // Predicated region
      $region53: #{vision_transformer_forward.5} parent=11 // pred_check
        %p346 = pneg %p275
      $region54: #{vision_transformer_forward.5} parent=11 // pred_check_branch
        %348 = sbr.rel (%p346) target = $region56
      $region55: #{vision_transformer_forward.5} parent=11 // pred_region
        _
      $region56: #{vision_transformer_forward.5} parent=11 // pred_fallthru
        _
    $region12: #{vision_transformer_forward.5} parent=5 // pred_fallthru
      _
    %p349 = scmp.lt.s32.totalorder %s18, 2
    // Predicated region
    $region57: #{vision_transformer_forward.5} parent=5 // pred_check
      %p350 = pneg %p349
    $region58: #{vision_transformer_forward.5} parent=5 // pred_check_branch
      %352 = sbr.rel (%p350) target = $region60
    $region59: #{vision_transformer_forward.5} parent=5 // pred_region
      // Predicated region
      $region61: #{vision_transformer_forward.5} parent=59 // pred_check
        %p353 = pneg %p38
      $region62: #{vision_transformer_forward.5} parent=59 // pred_check_branch
        %355 = sbr.rel (%p353) target = $region64
      $region63: #{vision_transformer_forward.5} parent=59 // pred_region
        %p356 = scmp.lt.s32.totalorder %s18, 1
        %s357 = scalar_select %p356, %s18, 1
        %s358 = smul.addr %s357, 3
        %s359 = smul.addr %s358, 8
        %s360 = scalar_lea.vmem %s0, %s359
      $region64: #{vision_transformer_forward.5} parent=59 // pred_fallthru
        _
    $region60: #{vision_transformer_forward.5} parent=5 // pred_fallthru
      _
    %p361 = scmp.le.s32.totalorder 1, %s18
    %p362 = scmp.lt.s32.totalorder %s18, 3
    %p363 = pnand %p361, %p362
    %p364 = pneg %p363
    // Predicated region
    $region65: #{vision_transformer_forward.5} parent=5 // pred_check
      _
    $region66: #{vision_transformer_forward.5} parent=5 // pred_check_branch
      %366 = sbr.rel (%p363) target = $region68
    $region67: #{vision_transformer_forward.5} parent=5 // pred_region
      %s367 = ssub.s32 %s18, 1
      %p368 = scmp.lt.s32.totalorder %s23, 1
      %s369 = scalar_select %p368, %s23, 1
      %s370 = smul.addr %s369, 3
      %s371 = smul.addr %s370, 8
      %s372 = scalar_lea.vmem %s0, %s371
      %p373 = pneg %p44
      %p374 = pneg %p41
      %p375 = pneg %p65
      %p376 = pneg %p62
      %p377 = pneg %p86
      %p378 = pneg %p83
      %p379 = pneg %p107
      %p380 = pneg %p104
      %p381 = pneg %p128
      %p382 = pneg %p125
      %p383 = pneg %p149
      %p384 = pneg %p146
      %p385 = pneg %p170
      %p386 = pneg %p167
      %p387 = pneg %p191
      %p388 = pneg %p188
      %p389 = pneg %p212
      %p390 = pneg %p209
      %p391 = pneg %p233
      %p392 = pneg %p230
      %p393 = pneg %p254
      %p394 = pneg %p251
      %p395 = pneg %p275
      %p396 = pneg %p272
      %p397 = pneg %p301
      %p398 = pneg %p298
      %p399 = scmp.lt.s32.totalorder %s23, 1
      %s400 = scalar_select %p399, %s23, 1
      %s401 = smul.addr %s400, 3
      %s402 = smul.addr %s401, 8
      %s403 = scalar_lea.vmem %s12, %s402
      %p404 = scmp.lt.s32.totalorder %s23, 1
      %s405 = scalar_select %p404, %s23, 1
      %s406 = smul.addr %s405, 3
      %s407 = smul.addr %s406, 8
      %s408 = scalar_lea.vmem %s0, %s407
      %p409 = scmp.lt.s32.totalorder %s23, 1
      %s410 = scalar_select %p409, %s23, 1
      %s411 = smul.addr %s410, 3
      %s412 = smul.addr %s411, 8
      %s413 = scalar_lea.vmem %s12, %s412
      %v415 = vld [vmem:[%s408] sm:$0xff]
      %v416 = vld [vmem:[%s408 + $0x8] sm:$0xff]
      %v417 = vld [vmem:[%s408 + $0x10] sm:$0x1]
      %v418 = vld [vmem:[%s1] sm:$0x1]
      %v419 = vld [vmem:[%s2] sm:$0x1]
      %vm420 = vcmask 261120
      %v421 = vsel %vm420, %v415, 0.0
      %422 = vadd.xlane.f32.xlu0 %v421
      %v423 = vpop.xlane.xlu0 %422
      %v424 = vsel %vm420, %v416, 0.0
      %425 = vadd.xlane.f32.xlu0 %v424
      %v426 = vpop.xlane.xlu0 %425
      %vm427 = vcmask 253952
      %v428 = vsel %vm427, %v417, 0.0
      %429 = vadd.xlane.f32.xlu0 %v428
      %v430 = vpop.xlane.xlu0 %429
      %v431 = vrcp.pop 32.0
      %v432 = vmul.f32 %v423, %v431
      %v433 = vmul.f32 %v426, %v431
      %v434 = vmul.f32 %v430, %v431
      %v435 = vsub.f32 %v415, %v432
      %v436 = vsub.f32 %v416, %v433
      %v437 = vsub.f32 %v417, %v434
      %v438 = vmul.f32 %v435, %v435
      %v439 = vmul.f32 %v436, %v436
      %v440 = vmul.f32 %v437, %v437
      %v441 = vsel %vm420, %v438, 0.0
      %442 = vadd.xlane.f32.xlu0 %v441
      %v443 = vpop.xlane.xlu0 %442
      %v444 = vsel %vm420, %v439, 0.0
      %445 = vadd.xlane.f32.xlu0 %v444
      %v446 = vpop.xlane.xlu0 %445
      %v447 = vsel %vm427, %v440, 0.0
      %448 = vadd.xlane.f32.xlu0 %v447
      %v449 = vpop.xlane.xlu0 %448
      %v450 = vmul.f32 %v443, %v431
      %v451 = vmul.f32 %v446, %v431
      %v452 = vmul.f32 %v449, %v431
      %v453 = vadd.f32 %v450, 1e-05
      %v454 = vadd.f32 %v451, 1e-05
      %v455 = vadd.f32 %v452, 1e-05
      %v456 = vrsqrt.pop %v453
      %v457 = vrsqrt.pop %v454
      %v458 = vrsqrt.pop %v455
      %v459 = vmul.f32 %v435, %v456
      %v460 = vmul.f32 %v436, %v457
      %v461 = vmul.f32 %v437, %v458
      %v463 = vlaneseq
      %v464 = vshrl.u32 %v463, 7
      %v465 = vsub.s32 0, %v464
      %v466 = vrot.slane %v418, %v465
      %v468 = vmul.f32 %v459, %v466
      %v469 = vmul.f32 %v460, %v466
      %v470 = vmul.f32 %v461, %v466
      %v472 = vlaneseq
      %v473 = vshrl.u32 %v472, 7
      %v474 = vsub.s32 0, %v473
      %v475 = vrot.slane %v419, %v474
      %v477 = vadd.f32 %v468, %v475
      %v478 = vadd.f32 %v469, %v475
      %v479 = vadd.f32 %v470, %v475
      %v480 = vpack.c.bf16 %v478, %v477
      %v481 = vpack.c.bf16 %v479, %v479
      %v482 = vld [vmem:[%s3] sm:$0xf]
      %v483 = vld [vmem:[%s3 + $0x4] sm:$0xf]
      %v484 = vld [vmem:[%s3 + $0x8] sm:$0xf]
      %v485 = vld [vmem:[%s3 + $0xc] sm:$0xf]
      %v490 = vunpack.c.l.b16 %v482
      %v491 = vunpack.c.l.b16 %v483
      %v492 = vunpack.c.l.b16 %v484
      %v493 = vunpack.c.l.b16 %v485
      %v494 = vpack.c.b16 %v491, %v490
      %v495 = vpack.c.b16 %v493, %v492
      %v499 = vsel %vm420, %v480, 0
      %v502 = vsel %vm420, %v481, 0
      %504 = vmatprep.subr.bf16.mxu0 0
      %505 = vmatpush1.bf16.msra.mxu0 %v494
      %506 = vmatprep.subr.bf16.mxu0 0
      %507 = vmatpush1.bf16.msra.mxu0 %v495
      %508 = vmatprep.subr.bf16.mxu0 0
      %509 = vmatpush1.bf16.msra.mxu0 0
      %510 = vmatprep.subr.bf16.mxu0 0
      %511 = vmatpush1.bf16.msra.mxu0 0
      %512 = vmatprep.subr.bf16.mxu0 0
      %513 = vmatpush1.bf16.msra.mxu0 0
      %514 = vmatprep.subr.bf16.mxu0 0
      %515 = vmatpush1.bf16.msra.mxu0 0
      %516 = vmatprep.subr.bf16.mxu0 0
      %517 = vmatpush1.bf16.msra.mxu0 0
      %518 = vmatprep.subr.bf16.mxu0 0
      %519 = vmatpush1.bf16.msra.mxu0 0
      %520 = vmatprep.subr.bf16.mxu0 0
      %521 = vmatpush1.bf16.msra.mxu0 0
      %522 = vmatprep.subr.bf16.mxu0 0
      %523 = vmatpush1.bf16.msra.mxu0 0
      %524 = vmatprep.subr.bf16.mxu0 0
      %525 = vmatpush1.bf16.msra.mxu0 0
      %526 = vmatprep.subr.bf16.mxu0 0
      %527 = vmatpush1.bf16.msra.mxu0 0
      %528 = vmatprep.subr.bf16.mxu0 0
      %529 = vmatpush1.bf16.msra.mxu0 0
      %530 = vmatprep.subr.bf16.mxu0 0
      %531 = vmatpush1.bf16.msra.mxu0 0
      %532 = vmatprep.subr.bf16.mxu0 0
      %533 = vmatpush1.bf16.msra.mxu0 0
      %534 = vmatprep.subr.bf16.mxu0 0
      %535 = vmatpush1.bf16.msra.mxu0 0
      %536 = vmatprep.mubr.bf16.mxu0 0
      %537 = vmatmul.mubr.bf16.gmra.mrb[0].mxu0 %v499
      %v538 = vpop.f32.mrb[0].mxu0
      %v539 = vadd.f32 0.0, %v538
      %v540 = vpop.f32.mrb[0].mxu0
      %v541 = vpop.f32.mrb[0].mxu0
      %v542 = vadd.f32 0.0, %v541
      %v543 = vpop.f32.mrb[0].mxu0
      %544 = vmatprep.mubr.bf16.mxu0 0
      %545 = vmatmul.mubr.bf16.gmra.mrb[0].mxu0 %v502
      %v546 = vpop.f32.mrb[0].mxu0
      %v547 = vadd.f32 0.0, %v546
      %v548 = vpop.f32.mrb[0].mxu0
      %v549 = vpop.f32.mrb[0].mxu0
      %v550 = vpop.f32.mrb[0].mxu0
      %551 = vdwg.mxu0
      %v552 = vld [vmem:[%s4] sm:$0xf]
      %v553 = vld [vmem:[%s4 + $0x4] sm:$0xf]
      %v554 = vld [vmem:[%s4 + $0x8] sm:$0xf]
      %v555 = vld [vmem:[%s4 + $0xc] sm:$0xf]
      %v556 = vmul.f32 %v539, 0.17677669
      %v557 = vmul.f32 %v542, 0.17677669
      %v558 = vmul.f32 %v547, 0.17677669
      %v559 = vpack.c.bf16 %v557, %v556
      %v560 = vpack.c.bf16 %v558, %v558
      %v561 = vpack.c.bf16 %v542, %v539
      %v562 = vpack.c.bf16 %v547, %v547
      %565 = vrot.lane.b32.xlu0 %v561, 96
      %v566 = vpop.permute.xlu0 %565
      %567 = vrot.lane.b32.xlu0 %v562, 96
      %v568 = vpop.permute.xlu0 %567
      %vm569 = vcmask 64512
      %v571 = vsel %vm569, %v559, 0
      %v574 = vsel %vm569, %v560, 0
      %v577 = vsel %vm569, %v566, 0
      %v580 = vsel %vm569, %v568, 0
      %582 = vmatprep.subr.bf16.mxu0 0
      %583 = vmatpush1.bf16.xpose.msra.mxu0 %v577
      %584 = vmatprep.subr.bf16.mxu0 0
      %585 = vmatpush1.bf16.xpose.msra.mxu0 %v580
      %586 = vmatprep.subr.bf16.mxu0 0
      %587 = vmatpush1.bf16.xpose.msra.mxu0 0
      %588 = vmatprep.subr.bf16.mxu0 0
      %589 = vmatpush1.bf16.xpose.msra.mxu0 0
      %590 = vmatprep.subr.bf16.mxu0 0
      %591 = vmatpush1.bf16.xpose.msra.mxu0 0
      %592 = vmatprep.subr.bf16.mxu0 0
      %593 = vmatpush1.bf16.xpose.msra.mxu0 0
      %594 = vmatprep.subr.bf16.mxu0 0
      %595 = vmatpush1.bf16.xpose.msra.mxu0 0
      %596 = vmatprep.subr.bf16.mxu0 0
      %597 = vmatpush1.bf16.xpose.msra.mxu0 0
      %598 = vmatprep.subr.bf16.mxu0 0
      %599 = vmatpush1.bf16.xpose.msra.mxu0 0
      %600 = vmatprep.subr.bf16.mxu0 0
      %601 = vmatpush1.bf16.xpose.msra.mxu0 0
      %602 = vmatprep.subr.bf16.mxu0 0
      %603 = vmatpush1.bf16.xpose.msra.mxu0 0
      %604 = vmatprep.subr.bf16.mxu0 0
      %605 = vmatpush1.bf16.xpose.msra.mxu0 0
      %606 = vmatprep.subr.bf16.mxu0 0
      %607 = vmatpush1.bf16.xpose.msra.mxu0 0
      %608 = vmatprep.subr.bf16.mxu0 0
      %609 = vmatpush1.bf16.xpose.msra.mxu0 0
      %610 = vmatprep.subr.bf16.mxu0 0
      %611 = vmatpush1.bf16.xpose.msra.mxu0 0
      %612 = vmatprep.subr.bf16.mxu0 0
      %613 = vmatpush1.bf16.xpose.msra.mxu0 0
      %614 = vmatprep.mubr.bf16.mxu0 0
      %615 = vmatmul.mubr.bf16.gmra.mrb[0].mxu0 %v571
      %v616 = vpop.f32.mrb[0].mxu0
      %v617 = vadd.f32 0.0, %v616
      %v618 = vpop.f32.mrb[0].mxu0
      %v619 = vpop.f32.mrb[0].mxu0
      %v620 = vadd.f32 0.0, %v619
      %v621 = vpop.f32.mrb[0].mxu0
      %622 = vmatprep.mubr.bf16.mxu0 0
      %623 = vmatmul.mubr.bf16.gmra.mrb[0].mxu0 %v574
      %v624 = vpop.f32.mrb[0].mxu0
      %v625 = vadd.f32 0.0, %v624
      %v626 = vpop.f32.mrb[0].mxu0
      %v627 = vpop.f32.mrb[0].mxu0
      %v628 = vpop.f32.mrb[0].mxu0
      %629 = vdwg.mxu0
      %vm630 = vcmask 138240
      %v631 = vsel %vm630, %v617, -inf
      %632 = vmax.xlane.f32.xlu0 %v631
      %v633 = vpop.xlane.xlu0 %632
      %v634 = vsel %vm630, %v620, -inf
      %635 = vmax.xlane.f32.xlu0 %v634
      %v636 = vpop.xlane.xlu0 %635
      %vm637 = vcmask 131072
      %v638 = vsel %vm637, %v625, -inf
      %639 = vmax.xlane.f32.xlu0 %v638
      %v640 = vpop.xlane.xlu0 %639
      %v641 = vsub.f32 %v617, %v633
      %v642 = vsub.f32 %v620, %v636
      %v643 = vsub.f32 %v625, %v640
      %v644 = vmul.f32 %v641, 1.442695
      %v645 = vpow.pop %v644
      %v646 = vmul.f32 %v642, 1.442695
      %v647 = vpow.pop %v646
      %v648 = vmul.f32 %v643, 1.442695
      %v649 = vpow.pop %v648
      %v650 = vsel %vm630, %v645, 0.0
      %651 = vadd.xlane.f32.xlu0 %v650
      %v652 = vpop.xlane.xlu0 %651
      %v653 = vsel %vm630, %v647, 0.0
      %654 = vadd.xlane.f32.xlu0 %v653
      %v655 = vpop.xlane.xlu0 %654
      %v656 = vsel %vm637, %v649, 0.0
      %657 = vadd.xlane.f32.xlu0 %v656
      %v658 = vpop.xlane.xlu0 %657
      %v659 = vrcp.pop %v652
      %v660 = vrcp.pop %v655
      %v661 = vrcp.pop %v658
      %v662 = vmul.f32 %v645, %v659
      %v663 = vmul.f32 %v647, %v660
      %v664 = vmul.f32 %v649, %v661
      %v665 = vpack.c.bf16 %v663, %v662
      %v666 = vpack.c.bf16 %v664, %v664
      %667 = vrot.lane.b32.xlu0 %v561, 64
      %v668 = vpop.permute.xlu0 %667
      %669 = vrot.lane.b32.xlu0 %v562, 64
      %v670 = vpop.permute.xlu0 %669
      %v673 = vsel %vm630, %v665, 0
      %v676 = vsel %vm630, %v666, 0
      %vm678 = vcmask 1040384
      %v679 = vsel 0, 4294967295, 65535
      %v680 = vsel %vm678, %v679, 0
      %v682 = vand.u32 %v670, %v680
      %684 = vmatprep.subr.bf16.mxu0 0
      %685 = vmatpush1.bf16.msra.mxu0 %v668
      %686 = vmatprep.subr.bf16.mxu0 0
      %687 = vmatpush1.bf16.msra.mxu0 %v682
      %688 = vmatprep.subr.bf16.mxu0 0
      %689 = vmatpush1.bf16.msra.mxu0 0
      %690 = vmatprep.subr.bf16.mxu0 0
      %691 = vmatpush1.bf16.msra.mxu0 0
      %692 = vmatprep.subr.bf16.mxu0 0
      %693 = vmatpush1.bf16.msra.mxu0 0
      %694 = vmatprep.subr.bf16.mxu0 0
      %695 = vmatpush1.bf16.msra.mxu0 0
      %696 = vmatprep.subr.bf16.mxu0 0
      %697 = vmatpush1.bf16.msra.mxu0 0
      %698 = vmatprep.subr.bf16.mxu0 0
      %699 = vmatpush1.bf16.msra.mxu0 0
      %700 = vmatprep.subr.bf16.mxu0 0
      %701 = vmatpush1.bf16.msra.mxu0 0
      %702 = vmatprep.subr.bf16.mxu0 0
      %703 = vmatpush1.bf16.msra.mxu0 0
      %704 = vmatprep.subr.bf16.mxu0 0
      %705 = vmatpush1.bf16.msra.mxu0 0
      %706 = vmatprep.subr.bf16.mxu0 0
      %707 = vmatpush1.bf16.msra.mxu0 0
      %708 = vmatprep.subr.bf16.mxu0 0
      %709 = vmatpush1.bf16.msra.mxu0 0
      %710 = vmatprep.subr.bf16.mxu0 0
      %711 = vmatpush1.bf16.msra.mxu0 0
      %712 = vmatprep.subr.bf16.mxu0 0
      %713 = vmatpush1.bf16.msra.mxu0 0
      %714 = vmatprep.subr.bf16.mxu0 0
      %715 = vmatpush1.bf16.msra.mxu0 0
      %716 = vmatprep.mubr.bf16.mxu0 0
      %717 = vmatmul.mubr.bf16.gmra.mrb[0].mxu0 %v673
      %v718 = vpop.f32.mrb[0].mxu0
      %v719 = vadd.f32 0.0, %v718
      %v720 = vpop.f32.mrb[0].mxu0
      %v721 = vpop.f32.mrb[0].mxu0
      %v722 = vadd.f32 0.0, %v721
      %v723 = vpop.f32.mrb[0].mxu0
      %724 = vmatprep.mubr.bf16.mxu0 0
      %725 = vmatmul.mubr.bf16.gmra.mrb[0].mxu0 %v676
      %v726 = vpop.f32.mrb[0].mxu0
      %v727 = vadd.f32 0.0, %v726
      %v728 = vpop.f32.mrb[0].mxu0
      %v729 = vpop.f32.mrb[0].mxu0
      %v730 = vpop.f32.mrb[0].mxu0
      %731 = vdwg.mxu0
      %v732 = vpack.c.bf16 %v722, %v719
      %v733 = vpack.c.bf16 %v727, %v727
      %736 = vrot.lane.b32.xlu0 %v559, 120
      %v737 = vpop.permute.xlu0 %736
      %738 = vrot.lane.b32.xlu0 %v560, 120
      %v739 = vpop.permute.xlu0 %738
      %740 = vrot.lane.b32.xlu0 %v561, 88
      %v741 = vpop.permute.xlu0 %740
      %742 = vrot.lane.b32.xlu0 %v562, 88
      %v743 = vpop.permute.xlu0 %742
      %v745 = vsel %vm569, %v737, 0
      %v748 = vsel %vm569, %v739, 0
      %v751 = vsel %vm569, %v741, 0
      %v754 = vsel %vm569, %v743, 0
      %756 = vmatprep.subr.bf16.mxu0 0
      %757 = vmatpush1.bf16.xpose.msra.mxu0 %v751
      %758 = vmatprep.subr.bf16.mxu0 0
      %759 = vmatpush1.bf16.xpose.msra.mxu0 %v754
      %760 = vmatprep.subr.bf16.mxu0 0
      %761 = vmatpush1.bf16.xpose.msra.mxu0 0
      %762 = vmatprep.subr.bf16.mxu0 0
      %763 = vmatpush1.bf16.xpose.msra.mxu0 0
      %764 = vmatprep.subr.bf16.mxu0 0
      %765 = vmatpush1.bf16.xpose.msra.mxu0 0
      %766 = vmatprep.subr.bf16.mxu0 0
      %767 = vmatpush1.bf16.xpose.msra.mxu0 0
      %768 = vmatprep.subr.bf16.mxu0 0
      %769 = vmatpush1.bf16.xpose.msra.mxu0 0
      %770 = vmatprep.subr.bf16.mxu0 0
      %771 = vmatpush1.bf16.xpose.msra.mxu0 0
      %772 = vmatprep.subr.bf16.mxu0 0
      %773 = vmatpush1.bf16.xpose.msra.mxu0 0
      %774 = vmatprep.subr.bf16.mxu0 0
      %775 = vmatpush1.bf16.xpose.msra.mxu0 0
      %776 = vmatprep.subr.bf16.mxu0 0
      %777 = vmatpush1.bf16.xpose.msra.mxu0 0
      %778 = vmatprep.subr.bf16.mxu0 0
      %779 = vmatpush1.bf16.xpose.msra.mxu0 0
      %780 = vmatprep.subr.bf16.mxu0 0
      %781 = vmatpush1.bf16.xpose.msra.mxu0 0
      %782 = vmatprep.subr.bf16.mxu0 0
      %783 = vmatpush1.bf16.xpose.msra.mxu0 0
      %784 = vmatprep.subr.bf16.mxu0 0
      %785 = vmatpush1.bf16.xpose.msra.mxu0 0
      %786 = vmatprep.subr.bf16.mxu0 0
      %787 = vmatpush1.bf16.xpose.msra.mxu0 0
      %788 = vmatprep.mubr.bf16.mxu0 0
      %789 = vmatmul.mubr.bf16.gmra.mrb[0].mxu0 %v745
      %v790 = vpop.f32.mrb[0].mxu0
      %v791 = vadd.f32 0.0, %v790
      %v792 = vpop.f32.mrb[0].mxu0
      %v793 = vpop.f32.mrb[0].mxu0
      %v794 = vadd.f32 0.0, %v793
      %v795 = vpop.f32.mrb[0].mxu0
      %796 = vmatprep.mubr.bf16.mxu0 0
      %797 = vmatmul.mubr.bf16.gmra.mrb[0].mxu0 %v748
      %v798 = vpop.f32.mrb[0].mxu0
      %v799 = vadd.f32 0.0, %v798
      %v800 = vpop.f32.mrb[0].mxu0
      %v801 = vpop.f32.mrb[0].mxu0
      %v802 = vpop.f32.mrb[0].mxu0
      %803 = vdwg.mxu0
      %v804 = vsel %vm630, %v791, -inf
      %805 = vmax.xlane.f32.xlu0 %v804
      %v806 = vpop.xlane.xlu0 %805
      %v807 = vsel %vm630, %v794, -inf
      %808 = vmax.xlane.f32.xlu0 %v807
      %v809 = vpop.xlane.xlu0 %808
      %v810 = vsel %vm637, %v799, -inf
      %811 = vmax.xlane.f32.xlu0 %v810
      %v812 = vpop.xlane.xlu0 %811
      %v813 = vsub.f32 %v791, %v806
      %v814 = vsub.f32 %v794, %v809
      %v815 = vsub.f32 %v799, %v812
      %v816 = vmul.f32 %v813, 1.442695
      %v817 = vpow.pop %v816
      %v818 = vmul.f32 %v814, 1.442695
      %v819 = vpow.pop %v818
      %v820 = vmul.f32 %v815, 1.442695
      %v821 = vpow.pop %v820
      %v822 = vsel %vm630, %v817, 0.0
      %823 = vadd.xlane.f32.xlu0 %v822
      %v824 = vpop.xlane.xlu0 %823
      %v825 = vsel %vm630, %v819, 0.0
      %826 = vadd.xlane.f32.xlu0 %v825
      %v827 = vpop.xlane.xlu0 %826
      %v828 = vsel %vm637, %v821, 0.0
      %829 = vadd.xlane.f32.xlu0 %v828
      %v830 = vpop.xlane.xlu0 %829
      %v831 = vrcp.pop %v824
      %v832 = vrcp.pop %v827
      %v833 = vrcp.pop %v830
      %v834 = vmul.f32 %v817, %v831
      %v835 = vmul.f32 %v819, %v832
      %v836 = vmul.f32 %v821, %v833
      %v837 = vpack.c.bf16 %v835, %v834
      %v838 = vpack.c.bf16 %v836, %v836
      %839 = vrot.lane.b32.xlu0 %v561, 56
      %v840 = vpop.permute.xlu0 %839
      %841 = vrot.lane.b32.xlu0 %v562, 56
      %v842 = vpop.permute.xlu0 %841
      %v845 = vsel %vm630, %v837, 0
      %v848 = vsel %vm630, %v838, 0
      %v851 = vand.u32 %v842, %v680
      %853 = vmatprep.subr.bf16.mxu0 0
      %854 = vmatpush1.bf16.msra.mxu0 %v840
      %855 = vmatprep.subr.bf16.mxu0 0
      %856 = vmatpush1.bf16.msra.mxu0 %v851
      %857 = vmatprep.subr.bf16.mxu0 0
      %858 = vmatpush1.bf16.msra.mxu0 0
      %859 = vmatprep.subr.bf16.mxu0 0
      %860 = vmatpush1.bf16.msra.mxu0 0
      %861 = vmatprep.subr.bf16.mxu0 0
      %862 = vmatpush1.bf16.msra.mxu0 0
      %863 = vmatprep.subr.bf16.mxu0 0
      %864 = vmatpush1.bf16.msra.mxu0 0
      %865 = vmatprep.subr.bf16.mxu0 0
      %866 = vmatpush1.bf16.msra.mxu0 0
      %867 = vmatprep.subr.bf16.mxu0 0
      %868 = vmatpush1.bf16.msra.mxu0 0
      %869 = vmatprep.subr.bf16.mxu0 0
      %870 = vmatpush1.bf16.msra.mxu0 0
      %871 = vmatprep.subr.bf16.mxu0 0
      %872 = vmatpush1.bf16.msra.mxu0 0
      %873 = vmatprep.subr.bf16.mxu0 0
      %874 = vmatpush1.bf16.msra.mxu0 0
      %875 = vmatprep.subr.bf16.mxu0 0
      %876 = vmatpush1.bf16.msra.mxu0 0
      %877 = vmatprep.subr.bf16.mxu0 0
      %878 = vmatpush1.bf16.msra.mxu0 0
      %879 = vmatprep.subr.bf16.mxu0 0
      %880 = vmatpush1.bf16.msra.mxu0 0
      %881 = vmatprep.subr.bf16.mxu0 0
      %882 = vmatpush1.bf16.msra.mxu0 0
      %883 = vmatprep.subr.bf16.mxu0 0
      %884 = vmatpush1.bf16.msra.mxu0 0
      %885 = vmatprep.mubr.bf16.mxu0 0
      %886 = vmatmul.mubr.bf16.gmra.mrb[0].mxu0 %v845
      %v887 = vpop.f32.mrb[0].mxu0
      %v888 = vadd.f32 0.0, %v887
      %v889 = vpop.f32.mrb[0].mxu0
      %v890 = vpop.f32.mrb[0].mxu0
      %v891 = vadd.f32 0.0, %v890
      %v892 = vpop.f32.mrb[0].mxu0
      %893 = vmatprep.mubr.bf16.mxu0 0
      %894 = vmatmul.mubr.bf16.gmra.mrb[0].mxu0 %v848
      %v895 = vpop.f32.mrb[0].mxu0
      %v896 = vadd.f32 0.0, %v895
      %v897 = vpop.f32.mrb[0].mxu0
      %v898 = vpop.f32.mrb[0].mxu0
      %v899 = vpop.f32.mrb[0].mxu0
      %900 = vdwg.mxu0
      %v901 = vpack.c.bf16 %v891, %v888
      %v902 = vpack.c.bf16 %v896, %v896
      %v904 = vsel %vm569, %v901, 0
      %v907 = vsel %vm569, %v902, 0
      %vm909 = vcmask 1043456
      %v911 = vsel %vm909, %v553, 0
      %913 = vmatprep.subr.bf16.mxu0 0
      %914 = vmatpush1.bf16.msra.mxu0 %v911
      %915 = vmatprep.subr.bf16.mxu0 0
      %916 = vmatpush1.bf16.msra.mxu0 0
      %917 = vmatprep.subr.bf16.mxu0 0
      %918 = vmatpush1.bf16.msra.mxu0 0
      %919 = vmatprep.subr.bf16.mxu0 0
      %920 = vmatpush1.bf16.msra.mxu0 0
      %921 = vmatprep.subr.bf16.mxu0 0
      %922 = vmatpush1.bf16.msra.mxu0 0
      %923 = vmatprep.subr.bf16.mxu0 0
      %924 = vmatpush1.bf16.msra.mxu0 0
      %925 = vmatprep.subr.bf16.mxu0 0
      %926 = vmatpush1.bf16.msra.mxu0 0
      %927 = vmatprep.subr.bf16.mxu0 0
      %928 = vmatpush1.bf16.msra.mxu0 0
      %929 = vmatprep.subr.bf16.mxu0 0
      %930 = vmatpush1.bf16.msra.mxu0 0
      %931 = vmatprep.subr.bf16.mxu0 0
      %932 = vmatpush1.bf16.msra.mxu0 0
      %933 = vmatprep.subr.bf16.mxu0 0
      %934 = vmatpush1.bf16.msra.mxu0 0
      %935 = vmatprep.subr.bf16.mxu0 0
      %936 = vmatpush1.bf16.msra.mxu0 0
      %937 = vmatprep.subr.bf16.mxu0 0
      %938 = vmatpush1.bf16.msra.mxu0 0
      %939 = vmatprep.subr.bf16.mxu0 0
      %940 = vmatpush1.bf16.msra.mxu0 0
      %941 = vmatprep.subr.bf16.mxu0 0
      %942 = vmatpush1.bf16.msra.mxu0 0
      %943 = vmatprep.subr.bf16.mxu0 0
      %944 = vmatpush1.bf16.msra.mxu0 0
      %945 = vmatprep.mubr.bf16.mxu0 0
      %946 = vmatmul.mubr.bf16.gmra.mrb[0].mxu0 %v904
      %v947 = vpop.f32.mrb[0].mxu0
      %v948 = vadd.f32 0.0, %v947
      %v949 = vpop.f32.mrb[0].mxu0
      %v950 = vpop.f32.mrb[0].mxu0
      %v951 = vadd.f32 0.0, %v950
      %v952 = vpop.f32.mrb[0].mxu0
      %953 = vmatprep.mubr.bf16.mxu0 0
      %954 = vmatmul.mubr.bf16.gmra.mrb[0].mxu0 %v907
      %v955 = vpop.f32.mrb[0].mxu0
      %v956 = vadd.f32 0.0, %v955
      %v957 = vpop.f32.mrb[0].mxu0
      %v958 = vpop.f32.mrb[0].mxu0
      %v959 = vpop.f32.mrb[0].mxu0
      %960 = vdwg.mxu0
      %v962 = vsel %vm569, %v732, 0
      %v965 = vsel %vm569, %v733, 0
      %v968 = vsel %vm909, %v552, 0
      %970 = vmatprep.subr.bf16.mxu0 0
      %971 = vmatpush1.bf16.msra.mxu0 %v968
      %972 = vmatprep.subr.bf16.mxu0 0
      %973 = vmatpush1.bf16.msra.mxu0 0
      %974 = vmatprep.subr.bf16.mxu0 0
      %975 = vmatpush1.bf16.msra.mxu0 0
      %976 = vmatprep.subr.bf16.mxu0 0
      %977 = vmatpush1.bf16.msra.mxu0 0
      %978 = vmatprep.subr.bf16.mxu0 0
      %979 = vmatpush1.bf16.msra.mxu0 0
      %980 = vmatprep.subr.bf16.mxu0 0
      %981 = vmatpush1.bf16.msra.mxu0 0
      %982 = vmatprep.subr.bf16.mxu0 0
      %983 = vmatpush1.bf16.msra.mxu0 0
      %984 = vmatprep.subr.bf16.mxu0 0
      %985 = vmatpush1.bf16.msra.mxu0 0
      %986 = vmatprep.subr.bf16.mxu0 0
      %987 = vmatpush1.bf16.msra.mxu0 0
      %988 = vmatprep.subr.bf16.mxu0 0
      %989 = vmatpush1.bf16.msra.mxu0 0
      %990 = vmatprep.subr.bf16.mxu0 0
      %991 = vmatpush1.bf16.msra.mxu0 0
      %992 = vmatprep.subr.bf16.mxu0 0
      %993 = vmatpush1.bf16.msra.mxu0 0
      %994 = vmatprep.subr.bf16.mxu0 0
      %995 = vmatpush1.bf16.msra.mxu0 0
      %996 = vmatprep.subr.bf16.mxu0 0
      %997 = vmatpush1.bf16.msra.mxu0 0
      %998 = vmatprep.subr.bf16.mxu0 0
      %999 = vmatpush1.bf16.msra.mxu0 0
      %1000 = vmatprep.subr.bf16.mxu0 0
      %1001 = vmatpush1.bf16.msra.mxu0 0
      %1002 = vmatprep.mubr.bf16.mxu0 0
      %1003 = vmatmul.mubr.bf16.gmra.mrb[0].mxu0 %v962
      %v1004 = vpop.f32.mrb[0].mxu0
      %v1005 = vadd.f32 %v948, %v1004
      %v1006 = vpop.f32.mrb[0].mxu0
      %v1007 = vpop.f32.mrb[0].mxu0
      %v1008 = vadd.f32 %v951, %v1007
      %v1009 = vpop.f32.mrb[0].mxu0
      %1010 = vmatprep.mubr.bf16.mxu0 0
      %1011 = vmatmul.mubr.bf16.gmra.mrb[0].mxu0 %v965
      %v1012 = vpop.f32.mrb[0].mxu0
      %v1013 = vadd.f32 %v956, %v1012
      %v1014 = vpop.f32.mrb[0].mxu0
      %v1015 = vpop.f32.mrb[0].mxu0
      %v1016 = vpop.f32.mrb[0].mxu0
      %1017 = vdwg.mxu0
      %1018 = vrot.lane.b32.xlu0 %v559, 112
      %v1019 = vpop.permute.xlu0 %1018
      %1020 = vrot.lane.b32.xlu0 %v560, 112
      %v1021 = vpop.permute.xlu0 %1020
      %1022 = vrot.lane.b32.xlu0 %v561, 80
      %v1023 = vpop.permute.xlu0 %1022
      %1024 = vrot.lane.b32.xlu0 %v562, 80
      %v1025 = vpop.permute.xlu0 %1024
      %v1027 = vsel %vm569, %v1019, 0
      %v1030 = vsel %vm569, %v1021, 0
      %v1033 = vsel %vm569, %v1023, 0
      %v1036 = vsel %vm569, %v1025, 0
      %1038 = vmatprep.subr.bf16.mxu0 0
      %1039 = vmatpush1.bf16.xpose.msra.mxu0 %v1033
      %1040 = vmatprep.subr.bf16.mxu0 0
      %1041 = vmatpush1.bf16.xpose.msra.mxu0 %v1036
      %1042 = vmatprep.subr.bf16.mxu0 0
      %1043 = vmatpush1.bf16.xpose.msra.mxu0 0
      %1044 = vmatprep.subr.bf16.mxu0 0
      %1045 = vmatpush1.bf16.xpose.msra.mxu0 0
      %1046 = vmatprep.subr.bf16.mxu0 0
      %1047 = vmatpush1.bf16.xpose.msra.mxu0 0
      %1048 = vmatprep.subr.bf16.mxu0 0
      %1049 = vmatpush1.bf16.xpose.msra.mxu0 0
      %1050 = vmatprep.subr.bf16.mxu0 0
      %1051 = vmatpush1.bf16.xpose.msra.mxu0 0
      %1052 = vmatprep.subr.bf16.mxu0 0
      %1053 = vmatpush1.bf16.xpose.msra.mxu0 0
      %1054 = vmatprep.subr.bf16.mxu0 0
      %1055 = vmatpush1.bf16.xpose.msra.mxu0 0
      %1056 = vmatprep.subr.bf16.mxu0 0
      %1057 = vmatpush1.bf16.xpose.msra.mxu0 0
      %1058 = vmatprep.subr.bf16.mxu0 0
      %1059 = vmatpush1.bf16.xpose.msra.mxu0 0
      %1060 = vmatprep.subr.bf16.mxu0 0
      %1061 = vmatpush1.bf16.xpose.msra.mxu0 0
      %1062 = vmatprep.subr.bf16.mxu0 0
      %1063 = vmatpush1.bf16.xpose.msra.mxu0 0
      %1064 = vmatprep.subr.bf16.mxu0 0
      %1065 = vmatpush1.bf16.xpose.msra.mxu0 0
      %1066 = vmatprep.subr.bf16.mxu0 0
      %1067 = vmatpush1.bf16.xpose.msra.mxu0 0
      %1068 = vmatprep.subr.bf16.mxu0 0
      %1069 = vmatpush1.bf16.xpose.msra.mxu0 0
      %1070 = vmatprep.mubr.bf16.mxu0 0
      %1071 = vmatmul.mubr.bf16.gmra.mrb[0].mxu0 %v1027
      %v1072 = vpop.f32.mrb[0].mxu0
      %v1073 = vadd.f32 0.0, %v1072
      %v1074 = vpop.f32.mrb[0].mxu0
      %v1075 = vpop.f32.mrb[0].mxu0
      %v1076 = vadd.f32 0.0, %v1075
      %v1077 = vpop.f32.mrb[0].mxu0
      %1078 = vmatprep.mubr.bf16.mxu0 0
      %1079 = vmatmul.mubr.bf16.gmra.mrb[0].mxu0 %v1030
      %v1080 = vpop.f32.mrb[0].mxu0
      %v1081 = vadd.f32 0.0, %v1080
      %v1082 = vpop.f32.mrb[0].mxu0
      %v1083 = vpop.f32.mrb[0].mxu0
      %v1084 = vpop.f32.mrb[0].mxu0
      %1085 = vdwg.mxu0
      %v1086 = vsel %vm630, %v1073, -inf
      %1087 = vmax.xlane.f32.xlu0 %v1086
      %v1088 = vpop.xlane.xlu0 %1087
      %v1089 = vsel %vm630, %v1076, -inf
      %1090 = vmax.xlane.f32.xlu0 %v1089
      %v1091 = vpop.xlane.xlu0 %1090
      %v1092 = vsel %vm637, %v1081, -inf
      %1093 = vmax.xlane.f32.xlu0 %v1092
      %v1094 = vpop.xlane.xlu0 %1093
      %v1095 = vsub.f32 %v1073, %v1088
      %v1096 = vsub.f32 %v1076, %v1091
      %v1097 = vsub.f32 %v1081, %v1094
      %v1098 = vmul.f32 %v1095, 1.442695
      %v1099 = vpow.pop %v1098
      %v1100 = vmul.f32 %v1096, 1.442695
      %v1101 = vpow.pop %v1100
      %v1102 = vmul.f32 %v1097, 1.442695
      %v1103 = vpow.pop %v1102
      %v1104 = vsel %vm630, %v1099, 0.0
      %1105 = vadd.xlane.f32.xlu0 %v1104
      %v1106 = vpop.xlane.xlu0 %1105
      %v1107 = vsel %vm630, %v1101, 0.0
      %1108 = vadd.xlane.f32.xlu0 %v1107
      %v1109 = vpop.xlane.xlu0 %1108
      %v1110 = vsel %vm637, %v1103, 0.0
      %1111 = vadd.xlane.f32.xlu0 %v1110
      %v1112 = vpop.xlane.xlu0 %1111
      %v1113 = vrcp.pop %v1106
      %v1114 = vrcp.pop %v1109
      %v1115 = vrcp.pop %v1112
      %v1116 = vmul.f32 %v1099, %v1113
      %v1117 = vmul.f32 %v1101, %v1114
      %v1118 = vmul.f32 %v1103, %v1115
      %v1119 = vpack.c.bf16 %v1117, %v1116
      %v1120 = vpack.c.bf16 %v1118, %v1118
      %1121 = vrot.lane.b32.xlu0 %v561, 48
      %v1122 = vpop.permute.xlu0 %1121
      %1123 = vrot.lane.b32.xlu0 %v562, 48
      %v1124 = vpop.permute.xlu0 %1123
      %v1127 = vsel %vm630, %v1119, 0
      %v1130 = vsel %vm630, %v1120, 0
      %v1133 = vand.u32 %v1124, %v680
      %1135 = vmatprep.subr.bf16.mxu0 0
      %1136 = vmatpush1.bf16.msra.mxu0 %v1122
      %1137 = vmatprep.subr.bf16.mxu0 0
      %1138 = vmatpush1.bf16.msra.mxu0 %v1133
      %1139 = vmatprep.subr.bf16.mxu0 0
      %1140 = vmatpush1.bf16.msra.mxu0 0
      %1141 = vmatprep.subr.bf16.mxu0 0
      %1142 = vmatpush1.bf16.msra.mxu0 0
      %1143 = vmatprep.subr.bf16.mxu0 0
      %1144 = vmatpush1.bf16.msra.mxu0 0
      %1145 = vmatprep.subr.bf16.mxu0 0
      %1146 = vmatpush1.bf16.msra.mxu0 0
      %1147 = vmatprep.subr.bf16.mxu0 0
      %1148 = vmatpush1.bf16.msra.mxu0 0
      %1149 = vmatprep.subr.bf16.mxu0 0
      %1150 = vmatpush1.bf16.msra.mxu0 0
      %1151 = vmatprep.subr.bf16.mxu0 0
      %1152 = vmatpush1.bf16.msra.mxu0 0
      %1153 = vmatprep.subr.bf16.mxu0 0
      %1154 = vmatpush1.bf16.msra.mxu0 0
      %1155 = vmatprep.subr.bf16.mxu0 0
      %1156 = vmatpush1.bf16.msra.mxu0 0
      %1157 = vmatprep.subr.bf16.mxu0 0
      %1158 = vmatpush1.bf16.msra.mxu0 0
      %1159 = vmatprep.subr.bf16.mxu0 0
      %1160 = vmatpush1.bf16.msra.mxu0 0
      %1161 = vmatprep.subr.bf16.mxu0 0
      %1162 = vmatpush1.bf16.msra.mxu0 0
      %1163 = vmatprep.subr.bf16.mxu0 0
      %1164 = vmatpush1.bf16.msra.mxu0 0
      %1165 = vmatprep.subr.bf16.mxu0 0
      %1166 = vmatpush1.bf16.msra.mxu0 0
      %1167 = vmatprep.mubr.bf16.mxu0 0
      %1168 = vmatmul.mubr.bf16.gmra.mrb[0].mxu0 %v1127
      %v1169 = vpop.f32.mrb[0].mxu0
      %v1170 = vadd.f32 0.0, %v1169
      %v1171 = vpop.f32.mrb[0].mxu0
      %v1172 = vpop.f32.mrb[0].mxu0
      %v1173 = vadd.f32 0.0, %v1172
      %v1174 = vpop.f32.mrb[0].mxu0
      %1175 = vmatprep.mubr.bf16.mxu0 0
      %1176 = vmatmul.mubr.bf16.gmra.mrb[0].mxu0 %v1130
      %v1177 = vpop.f32.mrb[0].mxu0
      %v1178 = vadd.f32 0.0, %v1177
      %v1179 = vpop.f32.mrb[0].mxu0
      %v1180 = vpop.f32.mrb[0].mxu0
      %v1181 = vpop.f32.mrb[0].mxu0
      %1182 = vdwg.mxu0
      %v1183 = vpack.c.bf16 %v1173, %v1170
      %v1184 = vpack.c.bf16 %v1178, %v1178
      %v1186 = vsel %vm569, %v1183, 0
      %v1189 = vsel %vm569, %v1184, 0
      %v1192 = vsel %vm909, %v554, 0
      %1194 = vmatprep.subr.bf16.mxu0 0
      %1195 = vmatpush1.bf16.msra.mxu0 %v1192
      %1196 = vmatprep.subr.bf16.mxu0 0
      %1197 = vmatpush1.bf16.msra.mxu0 0
      %1198 = vmatprep.subr.bf16.mxu0 0
      %1199 = vmatpush1.bf16.msra.mxu0 0
      %1200 = vmatprep.subr.bf16.mxu0 0
      %1201 = vmatpush1.bf16.msra.mxu0 0
      %1202 = vmatprep.subr.bf16.mxu0 0
      %1203 = vmatpush1.bf16.msra.mxu0 0
      %1204 = vmatprep.subr.bf16.mxu0 0
      %1205 = vmatpush1.bf16.msra.mxu0 0
      %1206 = vmatprep.subr.bf16.mxu0 0
      %1207 = vmatpush1.bf16.msra.mxu0 0
      %1208 = vmatprep.subr.bf16.mxu0 0
      %1209 = vmatpush1.bf16.msra.mxu0 0
      %1210 = vmatprep.subr.bf16.mxu0 0
      %1211 = vmatpush1.bf16.msra.mxu0 0
      %1212 = vmatprep.subr.bf16.mxu0 0
      %1213 = vmatpush1.bf16.msra.mxu0 0
      %1214 = vmatprep.subr.bf16.mxu0 0
      %1215 = vmatpush1.bf16.msra.mxu0 0
      %1216 = vmatprep.subr.bf16.mxu0 0
      %1217 = vmatpush1.bf16.msra.mxu0 0
      %1218 = vmatprep.subr.bf16.mxu0 0
      %1219 = vmatpush1.bf16.msra.mxu0 0
      %1220 = vmatprep.subr.bf16.mxu0 0
      %1221 = vmatpush1.bf16.msra.mxu0 0
      %1222 = vmatprep.subr.bf16.mxu0 0
      %1223 = vmatpush1.bf16.msra.mxu0 0
      %1224 = vmatprep.subr.bf16.mxu0 0
      %1225 = vmatpush1.bf16.msra.mxu0 0
      %1226 = vmatprep.mubr.bf16.mxu0 0
      %1227 = vmatmul.mubr.bf16.gmra.mrb[0].mxu0 %v1186
      %v1228 = vpop.f32.mrb[0].mxu0
      %v1229 = vadd.f32 0.0, %v1228
      %v1230 = vpop.f32.mrb[0].mxu0
      %v1231 = vpop.f32.mrb[0].mxu0
      %v1232 = vadd.f32 0.0, %v1231
      %v1233 = vpop.f32.mrb[0].mxu0
      %1234 = vmatprep.mubr.bf16.mxu0 0
      %1235 = vmatmul.mubr.bf16.gmra.mrb[0].mxu0 %v1189
      %v1236 = vpop.f32.mrb[0].mxu0
      %v1237 = vadd.f32 0.0, %v1236
      %v1238 = vpop.f32.mrb[0].mxu0
      %v1239 = vpop.f32.mrb[0].mxu0
      %v1240 = vpop.f32.mrb[0].mxu0
      %1241 = vdwg.mxu0
      %v1242 = vadd.f32 %v1005, %v1229
      %v1243 = vadd.f32 %v1008, %v1232
      %v1244 = vadd.f32 %v1013, %v1237
      %1245 = vrot.lane.b32.xlu0 %v559, 104
      %v1246 = vpop.permute.xlu0 %1245
      %1247 = vrot.lane.b32.xlu0 %v560, 104
      %v1248 = vpop.permute.xlu0 %1247
      %1249 = vrot.lane.b32.xlu0 %v561, 72
      %v1250 = vpop.permute.xlu0 %1249
      %1251 = vrot.lane.b32.xlu0 %v562, 72
      %v1252 = vpop.permute.xlu0 %1251
      %v1254 = vsel %vm569, %v1246, 0
      %v1257 = vsel %vm569, %v1248, 0
      %v1260 = vsel %vm569, %v1250, 0
      %v1263 = vsel %vm569, %v1252, 0
      %1265 = vmatprep.subr.bf16.mxu0 0
      %1266 = vmatpush1.bf16.xpose.msra.mxu0 %v1260
      %1267 = vmatprep.subr.bf16.mxu0 0
      %1268 = vmatpush1.bf16.xpose.msra.mxu0 %v1263
      %1269 = vmatprep.subr.bf16.mxu0 0
      %1270 = vmatpush1.bf16.xpose.msra.mxu0 0
      %1271 = vmatprep.subr.bf16.mxu0 0
      %1272 = vmatpush1.bf16.xpose.msra.mxu0 0
      %1273 = vmatprep.subr.bf16.mxu0 0
      %1274 = vmatpush1.bf16.xpose.msra.mxu0 0
      %1275 = vmatprep.subr.bf16.mxu0 0
      %1276 = vmatpush1.bf16.xpose.msra.mxu0 0
      %1277 = vmatprep.subr.bf16.mxu0 0
      %1278 = vmatpush1.bf16.xpose.msra.mxu0 0
      %1279 = vmatprep.subr.bf16.mxu0 0
      %1280 = vmatpush1.bf16.xpose.msra.mxu0 0
      %1281 = vmatprep.subr.bf16.mxu0 0
      %1282 = vmatpush1.bf16.xpose.msra.mxu0 0
      %1283 = vmatprep.subr.bf16.mxu0 0
      %1284 = vmatpush1.bf16.xpose.msra.mxu0 0
      %1285 = vmatprep.subr.bf16.mxu0 0
      %1286 = vmatpush1.bf16.xpose.msra.mxu0 0
      %1287 = vmatprep.subr.bf16.mxu0 0
      %1288 = vmatpush1.bf16.xpose.msra.mxu0 0
      %1289 = vmatprep.subr.bf16.mxu0 0
      %1290 = vmatpush1.bf16.xpose.msra.mxu0 0
      %1291 = vmatprep.subr.bf16.mxu0 0
      %1292 = vmatpush1.bf16.xpose.msra.mxu0 0
      %1293 = vmatprep.subr.bf16.mxu0 0
      %1294 = vmatpush1.bf16.xpose.msra.mxu0 0
      %1295 = vmatprep.subr.bf16.mxu0 0
      %1296 = vmatpush1.bf16.xpose.msra.mxu0 0
      %1297 = vmatprep.mubr.bf16.mxu0 0
      %1298 = vmatmul.mubr.bf16.gmra.mrb[0].mxu0 %v1254
      %v1299 = vpop.f32.mrb[0].mxu0
      %v1300 = vadd.f32 0.0, %v1299
      %v1301 = vpop.f32.mrb[0].mxu0
      %v1302 = vpop.f32.mrb[0].mxu0
      %v1303 = vadd.f32 0.0, %v1302
      %v1304 = vpop.f32.mrb[0].mxu0
      %1305 = vmatprep.mubr.bf16.mxu0 0
      %1306 = vmatmul.mubr.bf16.gmra.mrb[0].mxu0 %v1257
      %v1307 = vpop.f32.mrb[0].mxu0
      %v1308 = vadd.f32 0.0, %v1307
      %v1309 = vpop.f32.mrb[0].mxu0
      %v1310 = vpop.f32.mrb[0].mxu0
      %v1311 = vpop.f32.mrb[0].mxu0
      %1312 = vdwg.mxu0
      %v1313 = vsel %vm630, %v1300, -inf
      %1314 = vmax.xlane.f32.xlu0 %v1313
      %v1315 = vpop.xlane.xlu0 %1314
      %v1316 = vsel %vm630, %v1303, -inf
      %1317 = vmax.xlane.f32.xlu0 %v1316
      %v1318 = vpop.xlane.xlu0 %1317
      %v1319 = vsel %vm637, %v1308, -inf
      %1320 = vmax.xlane.f32.xlu0 %v1319
      %v1321 = vpop.xlane.xlu0 %1320
      %v1322 = vsub.f32 %v1300, %v1315
      %v1323 = vsub.f32 %v1303, %v1318
      %v1324 = vsub.f32 %v1308, %v1321
      %v1325 = vmul.f32 %v1322, 1.442695
      %v1326 = vpow.pop %v1325
      %v1327 = vmul.f32 %v1323, 1.442695
      %v1328 = vpow.pop %v1327
      %v1329 = vmul.f32 %v1324, 1.442695
      %v1330 = vpow.pop %v1329
      %v1331 = vsel %vm630, %v1326, 0.0
      %1332 = vadd.xlane.f32.xlu0 %v1331
      %v1333 = vpop.xlane.xlu0 %1332
      %v1334 = vsel %vm630, %v1328, 0.0
      %1335 = vadd.xlane.f32.xlu0 %v1334
      %v1336 = vpop.xlane.xlu0 %1335
      %v1337 = vsel %vm637, %v1330, 0.0
      %1338 = vadd.xlane.f32.xlu0 %v1337
      %v1339 = vpop.xlane.xlu0 %1338
      %v1340 = vrcp.pop %v1333
      %v1341 = vrcp.pop %v1336
      %v1342 = vrcp.pop %v1339
      %v1343 = vmul.f32 %v1326, %v1340
      %v1344 = vmul.f32 %v1328, %v1341
      %v1345 = vmul.f32 %v1330, %v1342
      %v1346 = vpack.c.bf16 %v1344, %v1343
      %v1347 = vpack.c.bf16 %v1345, %v1345
      %1348 = vrot.lane.b32.xlu0 %v561, 40
      %v1349 = vpop.permute.xlu0 %1348
      %1350 = vrot.lane.b32.xlu0 %v562, 40
      %v1351 = vpop.permute.xlu0 %1350
      %v1354 = vsel %vm630, %v1346, 0
      %v1357 = vsel %vm630, %v1347, 0
      %v1360 = vand.u32 %v1351, %v680
      %1362 = vmatprep.subr.bf16.mxu0 0
      %1363 = vmatpush1.bf16.msra.mxu0 %v1349
      %1364 = vmatprep.subr.bf16.mxu0 0
      %1365 = vmatpush1.bf16.msra.mxu0 %v1360
      %1366 = vmatprep.subr.bf16.mxu0 0
      %1367 = vmatpush1.bf16.msra.mxu0 0
      %1368 = vmatprep.subr.bf16.mxu0 0
      %1369 = vmatpush1.bf16.msra.mxu0 0
      %1370 = vmatprep.subr.bf16.mxu0 0
      %1371 = vmatpush1.bf16.msra.mxu0 0
      %1372 = vmatprep.subr.bf16.mxu0 0
      %1373 = vmatpush1.bf16.msra.mxu0 0
      %1374 = vmatprep.subr.bf16.mxu0 0
      %1375 = vmatpush1.bf16.msra.mxu0 0
      %1376 = vmatprep.subr.bf16.mxu0 0
      %1377 = vmatpush1.bf16.msra.mxu0 0
      %1378 = vmatprep.subr.bf16.mxu0 0
      %1379 = vmatpush1.bf16.msra.mxu0 0
      %1380 = vmatprep.subr.bf16.mxu0 0
      %1381 = vmatpush1.bf16.msra.mxu0 0
      %1382 = vmatprep.subr.bf16.mxu0 0
      %1383 = vmatpush1.bf16.msra.mxu0 0
      %1384 = vmatprep.subr.bf16.mxu0 0
      %1385 = vmatpush1.bf16.msra.mxu0 0
      %1386 = vmatprep.subr.bf16.mxu0 0
      %1387 = vmatpush1.bf16.msra.mxu0 0
      %1388 = vmatprep.subr.bf16.mxu0 0
      %1389 = vmatpush1.bf16.msra.mxu0 0
      %1390 = vmatprep.subr.bf16.mxu0 0
      %1391 = vmatpush1.bf16.msra.mxu0 0
      %1392 = vmatprep.subr.bf16.mxu0 0
      %1393 = vmatpush1.bf16.msra.mxu0 0
      %1394 = vmatprep.mubr.bf16.mxu0 0
      %1395 = vmatmul.mubr.bf16.gmra.mrb[0].mxu0 %v1354
      %v1396 = vpop.f32.mrb[0].mxu0
      %v1397 = vadd.f32 0.0, %v1396
      %v1398 = vpop.f32.mrb[0].mxu0
      %v1399 = vpop.f32.mrb[0].mxu0
      %v1400 = vadd.f32 0.0, %v1399
      %v1401 = vpop.f32.mrb[0].mxu0
      %1402 = vmatprep.mubr.bf16.mxu0 0
      %1403 = vmatmul.mubr.bf16.gmra.mrb[0].mxu0 %v1357
      %v1404 = vpop.f32.mrb[0].mxu0
      %v1405 = vadd.f32 0.0, %v1404
      %v1406 = vpop.f32.mrb[0].mxu0
      %v1407 = vpop.f32.mrb[0].mxu0
      %v1408 = vpop.f32.mrb[0].mxu0
      %1409 = vdwg.mxu0
      %v1410 = vpack.c.bf16 %v1400, %v1397
      %v1411 = vpack.c.bf16 %v1405, %v1405
      %v1413 = vsel %vm569, %v1410, 0
      %v1416 = vsel %vm569, %v1411, 0
      %v1419 = vsel %vm909, %v555, 0
      %1421 = vmatprep.subr.bf16.mxu0 0
      %1422 = vmatpush1.bf16.msra.mxu0 %v1419
      %1423 = vmatprep.subr.bf16.mxu0 0
      %1424 = vmatpush1.bf16.msra.mxu0 0
      %1425 = vmatprep.subr.bf16.mxu0 0
      %1426 = vmatpush1.bf16.msra.mxu0 0
      %1427 = vmatprep.subr.bf16.mxu0 0
      %1428 = vmatpush1.bf16.msra.mxu0 0
      %1429 = vmatprep.subr.bf16.mxu0 0
      %1430 = vmatpush1.bf16.msra.mxu0 0
      %1431 = vmatprep.subr.bf16.mxu0 0
      %1432 = vmatpush1.bf16.msra.mxu0 0
      %1433 = vmatprep.subr.bf16.mxu0 0
      %1434 = vmatpush1.bf16.msra.mxu0 0
      %1435 = vmatprep.subr.bf16.mxu0 0
      %1436 = vmatpush1.bf16.msra.mxu0 0
      %1437 = vmatprep.subr.bf16.mxu0 0
      %1438 = vmatpush1.bf16.msra.mxu0 0
      %1439 = vmatprep.subr.bf16.mxu0 0
      %1440 = vmatpush1.bf16.msra.mxu0 0
      %1441 = vmatprep.subr.bf16.mxu0 0
      %1442 = vmatpush1.bf16.msra.mxu0 0
      %1443 = vmatprep.subr.bf16.mxu0 0
      %1444 = vmatpush1.bf16.msra.mxu0 0
      %1445 = vmatprep.subr.bf16.mxu0 0
      %1446 = vmatpush1.bf16.msra.mxu0 0
      %1447 = vmatprep.subr.bf16.mxu0 0
      %1448 = vmatpush1.bf16.msra.mxu0 0
      %1449 = vmatprep.subr.bf16.mxu0 0
      %1450 = vmatpush1.bf16.msra.mxu0 0
      %1451 = vmatprep.subr.bf16.mxu0 0
      %1452 = vmatpush1.bf16.msra.mxu0 0
      %1453 = vmatprep.mubr.bf16.mxu0 0
      %1454 = vmatmul.mubr.bf16.gmra.mrb[0].mxu0 %v1413
      %v1455 = vpop.f32.mrb[0].mxu0
      %v1456 = vadd.f32 0.0, %v1455
      %v1457 = vpop.f32.mrb[0].mxu0
      %v1458 = vpop.f32.mrb[0].mxu0
      %v1459 = vadd.f32 0.0, %v1458
      %v1460 = vpop.f32.mrb[0].mxu0
      %1461 = vmatprep.mubr.bf16.mxu0 0
      %1462 = vmatmul.mubr.bf16.gmra.mrb[0].mxu0 %v1416
      %v1463 = vpop.f32.mrb[0].mxu0
      %v1464 = vadd.f32 0.0, %v1463
      %v1465 = vpop.f32.mrb[0].mxu0
      %v1466 = vpop.f32.mrb[0].mxu0
      %v1467 = vpop.f32.mrb[0].mxu0
      %1468 = vdwg.mxu0
      %v1469 = vadd.f32 %v1242, %v1456
      %v1470 = vadd.f32 %v1243, %v1459
      %v1471 = vadd.f32 %v1244, %v1464
      %v1472 = vld [vmem:[%s5] sm:$0x1]
      %v1474 = vlaneseq
      %v1475 = vshrl.u32 %v1474, 7
      %v1476 = vsub.s32 0, %v1475
      %v1477 = vrot.slane %v1472, %v1476
      %v1479 = vadd.f32 %v1469, %v1477
      %v1480 = vadd.f32 %v1470, %v1477
      %v1481 = vadd.f32 %v1471, %v1477
      %v1482 = vadd.f32 %v1479, %v415
      %v1483 = vadd.f32 %v1480, %v416
      %v1484 = vadd.f32 %v1481, %v417
      %v1485 = vld [vmem:[%s6] sm:$0x1]
      %v1486 = vld [vmem:[%s7] sm:$0x1]
      %v1487 = vsel %vm420, %v1482, 0.0
      %1488 = vadd.xlane.f32.xlu0 %v1487
      %v1489 = vpop.xlane.xlu0 %1488
      %v1490 = vsel %vm420, %v1483, 0.0
      %1491 = vadd.xlane.f32.xlu0 %v1490
      %v1492 = vpop.xlane.xlu0 %1491
      %v1493 = vsel %vm427, %v1484, 0.0
      %1494 = vadd.xlane.f32.xlu0 %v1493
      %v1495 = vpop.xlane.xlu0 %1494
      %v1496 = vmul.f32 %v1489, %v431
      %v1497 = vmul.f32 %v1492, %v431
      %v1498 = vmul.f32 %v1495, %v431
      %v1499 = vsub.f32 %v1482, %v1496
      %v1500 = vsub.f32 %v1483, %v1497
      %v1501 = vsub.f32 %v1484, %v1498
      %v1502 = vmul.f32 %v1499, %v1499
      %v1503 = vmul.f32 %v1500, %v1500
      %v1504 = vmul.f32 %v1501, %v1501
      %v1505 = vsel %vm420, %v1502, 0.0
      %1506 = vadd.xlane.f32.xlu0 %v1505
      %v1507 = vpop.xlane.xlu0 %1506
      %v1508 = vsel %vm420, %v1503, 0.0
      %1509 = vadd.xlane.f32.xlu0 %v1508
      %v1510 = vpop.xlane.xlu0 %1509
      %v1511 = vsel %vm427, %v1504, 0.0
      %1512 = vadd.xlane.f32.xlu0 %v1511
      %v1513 = vpop.xlane.xlu0 %1512
      %v1514 = vmul.f32 %v1507, %v431
      %v1515 = vmul.f32 %v1510, %v431
      %v1516 = vmul.f32 %v1513, %v431
      %v1517 = vadd.f32 %v1514, 1e-05
      %v1518 = vadd.f32 %v1515, 1e-05
      %v1519 = vadd.f32 %v1516, 1e-05
      %v1520 = vrsqrt.pop %v1517
      %v1521 = vrsqrt.pop %v1518
      %v1522 = vrsqrt.pop %v1519
      %v1523 = vmul.f32 %v1499, %v1520
      %v1524 = vmul.f32 %v1500, %v1521
      %v1525 = vmul.f32 %v1501, %v1522
      %v1527 = vlaneseq
      %v1528 = vshrl.u32 %v1527, 7
      %v1529 = vsub.s32 0, %v1528
      %v1530 = vrot.slane %v1485, %v1529
      %v1532 = vmul.f32 %v1523, %v1530
      %v1533 = vmul.f32 %v1524, %v1530
      %v1534 = vmul.f32 %v1525, %v1530
      %v1536 = vlaneseq
      %v1537 = vshrl.u32 %v1536, 7
      %v1538 = vsub.s32 0, %v1537
      %v1539 = vrot.slane %v1486, %v1538
      %v1541 = vadd.f32 %v1532, %v1539
      %v1542 = vadd.f32 %v1533, %v1539
      %v1543 = vadd.f32 %v1534, %v1539
      %v1544 = vpack.c.bf16 %v1542, %v1541
      %v1545 = vpack.c.bf16 %v1543, %v1543
      %v1546 = vld [vmem:[%s8] sm:$0xf]
      %v1547 = vld [vmem:[%s8 + $0x4] sm:$0xf]
      %v1548 = vld [vmem:[%s8 + $0x8] sm:$0xf]
      %v1549 = vld [vmem:[%s8 + $0xc] sm:$0xf]
      %v1550 = vld [vmem:[%s9] sm:$0x1]
      %v1552 = vlaneseq
      %v1553 = vshrl.u32 %v1552, 7
      %v1554 = vsub.s32 0, %v1553
      %v1555 = vrot.slane %v1550, %v1554
      %v1561 = vunpack.c.l.b16 %v1546
      %v1562 = vunpack.c.l.b16 %v1547
      %v1563 = vunpack.c.l.b16 %v1548
      %v1564 = vunpack.c.l.b16 %v1549
      %v1565 = vpack.c.b16 %v1562, %v1561
      %v1566 = vpack.c.b16 %v1564, %v1563
      %v1570 = vsel %vm420, %v1544, 0
      %v1573 = vsel %vm420, %v1545, 0
      %1575 = vmatprep.subr.bf16.mxu0 0
      %1576 = vmatpush1.bf16.msra.mxu0 %v1565
      %1577 = vmatprep.subr.bf16.mxu0 0
      %1578 = vmatpush1.bf16.msra.mxu0 %v1566
      %1579 = vmatprep.subr.bf16.mxu0 0
      %1580 = vmatpush1.bf16.msra.mxu0 0
      %1581 = vmatprep.subr.bf16.mxu0 0
      %1582 = vmatpush1.bf16.msra.mxu0 0
      %1583 = vmatprep.subr.bf16.mxu0 0
      %1584 = vmatpush1.bf16.msra.mxu0 0
      %1585 = vmatprep.subr.bf16.mxu0 0
      %1586 = vmatpush1.bf16.msra.mxu0 0
      %1587 = vmatprep.subr.bf16.mxu0 0
      %1588 = vmatpush1.bf16.msra.mxu0 0
      %1589 = vmatprep.subr.bf16.mxu0 0
      %1590 = vmatpush1.bf16.msra.mxu0 0
      %1591 = vmatprep.subr.bf16.mxu0 0
      %1592 = vmatpush1.bf16.msra.mxu0 0
      %1593 = vmatprep.subr.bf16.mxu0 0
      %1594 = vmatpush1.bf16.msra.mxu0 0
      %1595 = vmatprep.subr.bf16.mxu0 0
      %1596 = vmatpush1.bf16.msra.mxu0 0
      %1597 = vmatprep.subr.bf16.mxu0 0
      %1598 = vmatpush1.bf16.msra.mxu0 0
      %1599 = vmatprep.subr.bf16.mxu0 0
      %1600 = vmatpush1.bf16.msra.mxu0 0
      %1601 = vmatprep.subr.bf16.mxu0 0
      %1602 = vmatpush1.bf16.msra.mxu0 0
      %1603 = vmatprep.subr.bf16.mxu0 0
      %1604 = vmatpush1.bf16.msra.mxu0 0
      %1605 = vmatprep.subr.bf16.mxu0 0
      %1606 = vmatpush1.bf16.msra.mxu0 0
      %1607 = vmatprep.mubr.bf16.mxu0 0
      %1608 = vmatmul.mubr.bf16.gmra.mrb[0].mxu0 %v1570
      %v1609 = vpop.f32.mrb[0].mxu0
      %v1610 = vadd.f32 %v1555, %v1609
      %v1611 = vpop.f32.mrb[0].mxu0
      %v1612 = vpop.f32.mrb[0].mxu0
      %v1613 = vadd.f32 %v1555, %v1612
      %v1614 = vpop.f32.mrb[0].mxu0
      %1615 = vmatprep.mubr.bf16.mxu0 0
      %1616 = vmatmul.mubr.bf16.gmra.mrb[0].mxu0 %v1573
      %v1617 = vpop.f32.mrb[0].mxu0
      %v1618 = vadd.f32 %v1555, %v1617
      %v1619 = vpop.f32.mrb[0].mxu0
      %v1620 = vpop.f32.mrb[0].mxu0
      %v1621 = vpop.f32.mrb[0].mxu0
      %1622 = vdwg.mxu0
      %v1623 = vmul.f32 %v1610, 0.5
      %v1624 = vmul.f32 %v1613, 0.5
      %v1625 = vmul.f32 %v1618, 0.5
      %v1626 = vmul.f32 %v1610, 0.70710677
      %v1627 = vmul.f32 %v1613, 0.70710677
      %v1628 = vmul.f32 %v1618, 0.70710677
      %v1629 = verf.f32.pop %v1626
      %v1630 = verf.f32.pop %v1627
      %v1631 = verf.f32.pop %v1628
      %v1632 = vadd.f32 %v1629, 1.0
      %v1633 = vadd.f32 %v1630, 1.0
      %v1634 = vadd.f32 %v1631, 1.0
      %v1635 = vmul.f32 %v1623, %v1632
      %v1636 = vmul.f32 %v1624, %v1633
      %v1637 = vmul.f32 %v1625, %v1634
      %v1638 = vpack.c.bf16 %v1636, %v1635
      %v1639 = vpack.c.bf16 %v1637, %v1637
      %v1640 = vld [vmem:[%s10] sm:$0xf]
      %v1641 = vld [vmem:[%s10 + $0x4] sm:$0xf]
      %v1642 = vld [vmem:[%s10 + $0x8] sm:$0xf]
      %v1643 = vld [vmem:[%s10 + $0xc] sm:$0xf]
      %v1644 = vld [vmem:[%s10 + $0x10] sm:$0xf]
      %v1645 = vld [vmem:[%s10 + $0x14] sm:$0xf]
      %v1646 = vld [vmem:[%s10 + $0x18] sm:$0xf]
      %v1647 = vld [vmem:[%s10 + $0x1c] sm:$0xf]
      %v1648 = vld [vmem:[%s11] sm:$0x1]
      %v1650 = vlaneseq
      %v1651 = vshrl.u32 %v1650, 7
      %v1652 = vsub.s32 0, %v1651
      %v1653 = vrot.slane %v1648, %v1652
      %v1663 = vunpack.c.l.b16 %v1640
      %v1664 = vunpack.c.l.b16 %v1641
      %v1665 = vunpack.c.l.b16 %v1642
      %v1666 = vunpack.c.l.b16 %v1643
      %v1667 = vunpack.c.l.b16 %v1644
      %v1668 = vunpack.c.l.b16 %v1645
      %v1669 = vunpack.c.l.b16 %v1646
      %v1670 = vunpack.c.l.b16 %v1647
      %v1671 = vpack.c.b16 %v1664, %v1663
      %v1672 = vpack.c.b16 %v1666, %v1665
      %v1673 = vpack.c.b16 %v1668, %v1667
      %v1674 = vpack.c.b16 %v1670, %v1669
      %vm1679 = vcmask 523264
      %v1681 = vsel %vm1679, %v1638, 0
      %v1684 = vsel %vm1679, %v1639, 0
      %1686 = vmatprep.subr.bf16.mxu0 0
      %1687 = vmatpush1.bf16.msra.mxu0 %v1671
      %1688 = vmatprep.subr.bf16.mxu0 0
      %1689 = vmatpush1.bf16.msra.mxu0 %v1672
      %1690 = vmatprep.subr.bf16.mxu0 0
      %1691 = vmatpush1.bf16.msra.mxu0 %v1673
      %1692 = vmatprep.subr.bf16.mxu0 0
      %1693 = vmatpush1.bf16.msra.mxu0 %v1674
      %1694 = vmatprep.subr.bf16.mxu0 0
      %1695 = vmatpush1.bf16.msra.mxu0 0
      %1696 = vmatprep.subr.bf16.mxu0 0
      %1697 = vmatpush1.bf16.msra.mxu0 0
      %1698 = vmatprep.subr.bf16.mxu0 0
      %1699 = vmatpush1.bf16.msra.mxu0 0
      %1700 = vmatprep.subr.bf16.mxu0 0
      %1701 = vmatpush1.bf16.msra.mxu0 0
      %1702 = vmatprep.subr.bf16.mxu0 0
      %1703 = vmatpush1.bf16.msra.mxu0 0
      %1704 = vmatprep.subr.bf16.mxu0 0
      %1705 = vmatpush1.bf16.msra.mxu0 0
      %1706 = vmatprep.subr.bf16.mxu0 0
      %1707 = vmatpush1.bf16.msra.mxu0 0
      %1708 = vmatprep.subr.bf16.mxu0 0
      %1709 = vmatpush1.bf16.msra.mxu0 0
      %1710 = vmatprep.subr.bf16.mxu0 0
      %1711 = vmatpush1.bf16.msra.mxu0 0
      %1712 = vmatprep.subr.bf16.mxu0 0
      %1713 = vmatpush1.bf16.msra.mxu0 0
      %1714 = vmatprep.subr.bf16.mxu0 0
      %1715 = vmatpush1.bf16.msra.mxu0 0
      %1716 = vmatprep.subr.bf16.mxu0 0
      %1717 = vmatpush1.bf16.msra.mxu0 0
      %1718 = vmatprep.mubr.bf16.mxu0 0
      %1719 = vmatmul.mubr.bf16.gmra.mrb[0].mxu0 %v1681
      %v1720 = vpop.f32.mrb[0].mxu0
      %v1721 = vadd.f32 %v1653, %v1720
      %v1722 = vpop.f32.mrb[0].mxu0
      %v1723 = vpop.f32.mrb[0].mxu0
      %v1724 = vadd.f32 %v1653, %v1723
      %v1725 = vpop.f32.mrb[0].mxu0
      %1726 = vmatprep.mubr.bf16.mxu0 0
      %1727 = vmatmul.mubr.bf16.gmra.mrb[0].mxu0 %v1684
      %v1728 = vpop.f32.mrb[0].mxu0
      %v1729 = vadd.f32 %v1653, %v1728
      %v1730 = vpop.f32.mrb[0].mxu0
      %v1731 = vpop.f32.mrb[0].mxu0
      %v1732 = vpop.f32.mrb[0].mxu0
      %1733 = vdwg.mxu0
      %v1734 = vadd.f32 %v1721, %v1482
      %v1735 = vadd.f32 %v1724, %v1483
      %v1736 = vadd.f32 %v1729, %v1484
      %1737 = vst.msk [vmem:[%s413] sm:$0xff] %vm420, %v1734
      %1738 = vst.msk [vmem:[%s413 + $0x8] sm:$0xff] %vm420, %v1735
      %1739 = vst.msk [vmem:[%s413 + $0x10] sm:$0x1] %vm427, %v1736
      %p1740 = scmp.lt.s32.totalorder %s23, 1
      %s1741 = scalar_select %p1740, %s23, 1
      %s1742 = smul.addr %s1741, 3
      %s1743 = smul.addr %s1742, 8
      %s1744 = scalar_lea.vmem %s12, %s1743
      // Predicated region
      $region69: #{vision_transformer_forward.5} parent=67 // pred_check
        %p1745 = pneg %p298
      $region70: #{vision_transformer_forward.5} parent=67 // pred_check_branch
        %1747 = sbr.rel (%p1745) target = $region72
      $region71: #{vision_transformer_forward.5} parent=67 // pred_region
        _
      $region72: #{vision_transformer_forward.5} parent=67 // pred_fallthru
        _
    $region68: #{vision_transformer_forward.5} parent=5 // pred_fallthru
      _
    %p1748 = scmp.le.s32.totalorder 2, %s18
    // Predicated region
    $region73: #{vision_transformer_forward.5} parent=5 // pred_check
      %p1749 = pneg %p1748
    $region74: #{vision_transformer_forward.5} parent=5 // pred_check_branch
      %1751 = sbr.rel (%p1749) target = $region76
    $region75: #{vision_transformer_forward.5} parent=5 // pred_region
      %s1752 = ssub.s32 %s18, 2
      // Predicated region
      $region77: #{vision_transformer_forward.5} parent=75 // pred_check
        %p1753 = pneg %p304
      $region78: #{vision_transformer_forward.5} parent=75 // pred_check_branch
        %1755 = sbr.rel (%p1753) target = $region80
      $region79: #{vision_transformer_forward.5} parent=75 // pred_region
        %p1756 = scmp.lt.s32.totalorder %s24, 1
        %s1757 = scalar_select %p1756, %s24, 1
        %s1758 = smul.addr %s1757, 3
        %s1759 = smul.addr %s1758, 8
        %s1760 = scalar_lea.vmem %s12, %s1759
      $region80: #{vision_transformer_forward.5} parent=75 // pred_fallthru
        _
    $region76: #{vision_transformer_forward.5} parent=5 // pred_fallthru
      _
  $region6: #{vision_transformer_forward.5} parent=0 // loop_footer
    %s22 = sadd.s32 1, %s18
  $region7: #{vision_transformer_forward.5} parent=0 // loop_footer_branch
    %17 = sbr.rel target = $region3
  $region8: #{vision_transformer_forward.5} parent=0 // loop_exit
    _

</llo_original>
